<compile_context>
chip_gen: v6e
topology: v6e:2x2x1
jax: 0.10.0
libtpu: 0.0.40
codegen_flags: <defaults>
</compile_context>

<pallas_src>
import functools

import jax
import jax.numpy as jnp
from jax.experimental import pallas as pl
from jax.experimental.pallas import tpu as pltpu


def cbam_kernel(x_ref, fcw_ref, fcb_ref, saw_ref, o_ref, *, ks, pad, W, chan_chunk):
    """One block of Nb batch elements per grid step.

    x_ref   : (Nb, C, H*W)  VMEM  input feature maps (lane-dense last dim)
    fcw_ref : (C, C)        VMEM  transposed 1x1-conv weight [c_in, c_out]
    fcb_ref : (1, C)        VMEM  1x1-conv bias
    saw_ref : (2*ks*ks,)    SMEM  flattened spatial-conv weight [mean taps | max taps]
    o_ref   : (Nb, C, H*W)  VMEM  output
    """
    Nb, C, HW = x_ref.shape
    x_dtype = x_ref.dtype

    # ---------------- Channel attention ----------------
    # Global average pool: single lane-dim reduction, f32 accumulation.
    pooled = jnp.sum(x_ref[...], axis=2, dtype=jnp.float32) * (1.0 / HW)    # (Nb, C)

    if C <= 64:
        # Tiny C: VPU broadcast-FMA over weight rows (a 1/128-utilized MXU
        # GEMV is pure spin-up latency here).
        y = jnp.zeros((Nb, C), jnp.float32)
        for c in range(C):
            y = y + pooled[:, c:c + 1] * fcw_ref[c:c + 1, :]
    else:
        # Nb-wide matmul on the MXU: (Nb, C) @ (C, C).
        y = jnp.dot(pooled, fcw_ref[...], preferred_element_type=jnp.float32)
    y = y + fcb_ref[...]
    ca = jax.nn.sigmoid(y)                                                   # (Nb, C) f32
    ca_x = ca.astype(x_dtype)                                                # keep bf16 path bf16

    # ---------------- Spatial attention: channel mean / max of x*ca ----------------
    # Chunked over channels: no full (Nb, C, HW) f32 transient is kept alive;
    # only (Nb, HW) f32 running-sum / running-max accumulators.
    sum_acc = jnp.zeros((Nb, HW), jnp.float32)
    max_acc = jnp.full((Nb, HW), -jnp.inf, jnp.float32)
    for c0 in range(0, C, chan_chunk):
        cc = min(chan_chunk, C - c0)
        prod = x_ref[:, c0:c0 + cc, :] * ca_x[:, c0:c0 + cc, None]          # (Nb, cc, HW)
        sum_acc = sum_acc + jnp.sum(prod, axis=1, dtype=jnp.float32)
        max_acc = jnp.maximum(max_acc, jnp.max(prod, axis=1).astype(jnp.float32))
    mean_c = sum_acc * (1.0 / C)                                             # (Nb, HW)
    max_c = max_acc                                                          # (Nb, HW)

    # ks x ks conv (2 -> 1 channel, no bias) in the flattened domain: pad the
    # mean and max rows once (separately: no per-tap sublane extracts), then
    # one static lane-shifted slice per (kh, kw) tap. Taps falling off the H
    # boundary land in the zero pad; W-boundary wrap-around is zeroed by a
    # per-kw column mask built from an in-kernel iota (shared across the ks
    # kh-offsets).
    P = pad * W + pad
    mean_pad = jnp.pad(mean_c, ((0, 0), (P, P)))                             # (Nb, HW + 2P)
    max_pad = jnp.pad(max_c, ((0, 0), (P, P)))

    col = jax.lax.broadcasted_iota(jnp.int32, (1, HW), 1) % W                # (1, HW)
    acc = jnp.zeros((Nb, HW), jnp.float32)
    for kw in range(ks):
        dw = kw - pad
        valid = jnp.logical_and(col + dw >= 0, col + dw < W)                 # (1, HW) bool
        acc_kw = jnp.zeros((Nb, HW), jnp.float32)
        for kh in range(ks):
            dh = kh - pad
            start = P + dh * W + dw
            w_mean = saw_ref[kh * ks + kw]                                   # SMEM scalar
            w_max = saw_ref[ks * ks + kh * ks + kw]                          # SMEM scalar
            acc_kw = (acc_kw
                      + w_mean * mean_pad[:, start:start + HW]
                      + w_max * max_pad[:, start:start + HW])
        acc = acc + jnp.where(valid, acc_kw, 0.0)
    sa = jax.nn.sigmoid(acc)                                                 # (Nb, HW) f32
    sa_x = sa.astype(x_dtype)

    # ---------------- Output: x * ca * sa (recompute the cheap scale) ----------------
    o_ref[...] = (x_ref[...] * ca_x[:, :, None] * sa_x[:, None, :]).astype(o_ref.dtype)


def cbam_forward(x, fc_w, fc_b, sa_w, kernel_size=7):
    """x: (N, C, H, W); fc_w: (C, C); fc_b: (C,); sa_w: (1, 2, ks, ks)."""
    N, C, H, W = x.shape
    ks = kernel_size
    pad = 3 if ks == 7 else 1
    assert W > pad, "flattened-conv column masking requires W > pad"
    HW = H * W
    chan_chunk = min(C, 32)

    # Free, contiguous reshape to a lane-dense (N, C, H*W) view (no transpose).
    x2 = x.reshape(N, C, HW)
    fcw_t = jnp.asarray(fc_w, jnp.float32).T            # (C_in, C_out)
    fcb_2d = jnp.asarray(fc_b, jnp.float32).reshape(1, C)
    saw_flat = jnp.asarray(sa_w, jnp.float32).reshape(-1)   # [mean taps | max taps]

    # Generation-aware VMEM budget (~20% headroom below physical capacity).
    try:
        vmem_cap = int(pltpu.get_tpu_info().vmem_capacity_bytes)
    except Exception:  # conservative fallback
        vmem_cap = 64 * 1024 * 1024
    vmem_budget = int(0.8 * vmem_cap)

    itemsize = x.dtype.itemsize
    per_batch_block = C * HW * itemsize

    def _per_step_bytes(nb):
        io = 4 * nb * per_batch_block                           # in + out, double-buffered
        rows = 8 * nb * (HW + 2 * (pad * W + pad)) * 4          # f32 row transients
        chunk = nb * chan_chunk * HW * itemsize                 # transient channel chunk
        fixed = (C * C + C) * 4 + (2 << 20)                     # weights + headroom
        return io + rows + chunk + fixed

    # Pick Nb (batch elements per grid step): amortize per-step overhead,
    # stay under the VMEM budget, and keep >= 2 grid steps when N allows it
    # (so the megacore "parallel" axis still splits).
    nb = 1
    for cand in range(min(N, 8), 0, -1):
        if N % cand != 0:
            continue
        if _per_step_bytes(cand) > vmem_budget:
            continue
        if cand > 1 and N >= 2 and (N // cand) < 2:
            continue
        nb = cand
        break

    needed = _per_step_bytes(nb)
    vmem_limit = int(min(vmem_budget, max(32 * 1024 * 1024, needed)))

    kernel = functools.partial(cbam_kernel, ks=ks, pad=pad, W=W, chan_chunk=chan_chunk)
    out = pl.pallas_call(
        kernel,
        out_shape=jax.ShapeDtypeStruct((N, C, HW), x.dtype),
        grid_spec=pltpu.PrefetchScalarGridSpec(
            num_scalar_prefetch=0,
            grid=(N // nb,),
            in_specs=[
                pl.BlockSpec((nb, C, HW), lambda n: (n, 0, 0)),
                pl.BlockSpec((C, C), lambda n: (0, 0)),
                pl.BlockSpec((1, C), lambda n: (0, 0)),
                # small scalar weight table -> SMEM, read as scalars per tap
                pl.BlockSpec(memory_space=pltpu.MemorySpace.SMEM),
            ],
            out_specs=pl.BlockSpec((nb, C, HW), lambda n: (n, 0, 0)),
        ),
        compiler_params=pltpu.CompilerParams(
            dimension_semantics=("parallel",),
            vmem_limit_bytes=vmem_limit),
    )(x2, fcw_t, fcb_2d, saw_flat)
    return out.reshape(N, C, H, W)


def cbam_ref(x, fc_w, fc_b, sa_w):
    """Pure-JAX reference mirroring the PyTorch CBAM forward."""
    pooled = jnp.mean(x, axis=(2, 3), keepdims=True)                   # (N,C,1,1)
    y = jnp.einsum("oc,nchw->nohw", fc_w, pooled) + fc_b[None, :, None, None]
    xc = x * jax.nn.sigmoid(y)
    cat = jnp.concatenate([jnp.mean(xc, axis=1, keepdims=True),
                           jnp.max(xc, axis=1, keepdims=True)], axis=1)
    p = sa_w.shape[-1] // 2
    conv = jax.lax.conv_general_dilated(
        cat, sa_w, window_strides=(1, 1), padding=[(p, p), (p, p)],
        dimension_numbers=("NCHW", "OIHW", "NCHW"))
    return xc * jax.nn.sigmoid(conv)


if __name__ == "__main__":
    N, C, H, W = 2, 4, 16, 16
    ks = 7

    key = jax.random.PRNGKey(0)
    kx, kw1, kb1, kw2 = jax.random.split(key, 4)
    x = jax.random.normal(kx, (N, C, H, W), jnp.float32)
    # Deterministic synthetic parameters (shapes from CBAM.__init__).
    fc_w = jax.random.normal(kw1, (C, C), jnp.float32) * 0.5        # ChannelAttention.fc
    fc_b = jax.random.normal(kb1, (C,), jnp.float32) * 0.1
    sa_w = jax.random.normal(kw2, (1, 2, ks, ks), jnp.float32) * 0.2  # SpatialAttention.cv1

    out = jax.block_until_ready(cbam_forward(x, fc_w, fc_b, sa_w, kernel_size=ks))
    ref = jax.block_until_ready(cbam_ref(x, fc_w, fc_b, sa_w))

    assert out.shape == (N, C, H, W)
    max_err = float(jnp.max(jnp.abs(out - ref)))
    assert jnp.allclose(out, ref, atol=1e-4, rtol=1e-4), max_err
    print("KERNEL_OK")
</pallas_src>

<mosaic_0001>
module attributes {stable_mosaic.version = 11 : i64} {
  func.func @cbam_kernel(%arg0: i32, %arg1: memref<1x4x256xf32, #tpu.memory_space<vmem>>, %arg2: memref<4x4xf32, #tpu.memory_space<vmem>>, %arg3: memref<1x4xf32, #tpu.memory_space<vmem>>, %arg4: memref<98xf32, #tpu.memory_space<smem>>, %arg5: memref<1x4x256xf32, #tpu.memory_space<vmem>>) attributes {dimension_semantics = [#tpu.dimension_semantics<parallel>], iteration_bounds = array<i64: 2>, scalar_prefetch = 0 : i64, scratch_operands = 0 : i64, tpu.core_type = #tpu.core_type<tc>, window_params = [{transform_indices = @transform_0, window_bounds = array<i64: 1, 4, 256>}, {pipeline_mode = #tpu.pipeline_mode<synchronous>, transform_indices = @transform_1, window_bounds = array<i64: 4, 4>}, {pipeline_mode = #tpu.pipeline_mode<synchronous>, transform_indices = @transform_2, window_bounds = array<i64: 1, 4>}, {transform_indices = @transform_3, window_bounds = array<i64: 98>}, {transform_indices = @transform_4, window_bounds = array<i64: 1, 4, 256>}]} {
    %c0 = arith.constant 0 : index
    %c0_0 = arith.constant 0 : index
    %c0_1 = arith.constant 0 : index
    %0 = vector.load %arg1[%c0, %c0_0, %c0_1] : memref<1x4x256xf32, #tpu.memory_space<vmem>>, vector<1x4x256xf32>
    %cst = arith.constant dense<0.000000e+00> : vector<1x4xf32>
    %1 = vector.multi_reduction <add>, %0, %cst [2] : vector<1x4x256xf32> to vector<1x4xf32>
    %cst_2 = arith.constant 3.906250e-03 : f32
    %2 = vector.broadcast %cst_2 : f32 to vector<1x4xf32>
    %3 = arith.mulf %1, %2 : vector<1x4xf32>
    %cst_3 = arith.constant 0.000000e+00 : f32
    %4 = vector.broadcast %cst_3 : f32 to vector<1x4xf32>
    %5 = vector.extract_strided_slice %3 {offsets = [0, 0], sizes = [1, 1], strides = [1, 1]} : vector<1x4xf32> to vector<1x1xf32>
    %c0_4 = arith.constant 0 : index
    %c0_5 = arith.constant 0 : index
    %6 = vector.load %arg2[%c0_4, %c0_5] : memref<4x4xf32, #tpu.memory_space<vmem>>, vector<1x4xf32>
    %7 = vector.broadcast %5 : vector<1x1xf32> to vector<1x4xf32>
    %8 = arith.mulf %7, %6 : vector<1x4xf32>
    %9 = arith.addf %4, %8 : vector<1x4xf32>
    %10 = vector.extract_strided_slice %3 {offsets = [0, 1], sizes = [1, 1], strides = [1, 1]} : vector<1x4xf32> to vector<1x1xf32>
    %c1 = arith.constant 1 : index
    %c0_6 = arith.constant 0 : index
    %11 = vector.load %arg2[%c1, %c0_6] : memref<4x4xf32, #tpu.memory_space<vmem>>, vector<1x4xf32>
    %12 = vector.broadcast %10 : vector<1x1xf32> to vector<1x4xf32>
    %13 = arith.mulf %12, %11 : vector<1x4xf32>
    %14 = arith.addf %9, %13 : vector<1x4xf32>
    %15 = vector.extract_strided_slice %3 {offsets = [0, 2], sizes = [1, 1], strides = [1, 1]} : vector<1x4xf32> to vector<1x1xf32>
    %c2 = arith.constant 2 : index
    %c0_7 = arith.constant 0 : index
    %16 = vector.load %arg2[%c2, %c0_7] : memref<4x4xf32, #tpu.memory_space<vmem>>, vector<1x4xf32>
    %17 = vector.broadcast %15 : vector<1x1xf32> to vector<1x4xf32>
    %18 = arith.mulf %17, %16 : vector<1x4xf32>
    %19 = arith.addf %14, %18 : vector<1x4xf32>
    %20 = vector.extract_strided_slice %3 {offsets = [0, 3], sizes = [1, 1], strides = [1, 1]} : vector<1x4xf32> to vector<1x1xf32>
    %c3 = arith.constant 3 : index
    %c0_8 = arith.constant 0 : index
    %21 = vector.load %arg2[%c3, %c0_8] : memref<4x4xf32, #tpu.memory_space<vmem>>, vector<1x4xf32>
    %22 = vector.broadcast %20 : vector<1x1xf32> to vector<1x4xf32>
    %23 = arith.mulf %22, %21 : vector<1x4xf32>
    %24 = arith.addf %19, %23 : vector<1x4xf32>
    %c0_9 = arith.constant 0 : index
    %c0_10 = arith.constant 0 : index
    %25 = vector.load %arg3[%c0_9, %c0_10] : memref<1x4xf32, #tpu.memory_space<vmem>>, vector<1x4xf32>
    %26 = arith.addf %24, %25 : vector<1x4xf32>
    %27 = arith.negf %26 : vector<1x4xf32>
    %28 = math.exp %27 : vector<1x4xf32>
    %cst_11 = arith.constant 1.000000e+00 : f32
    %29 = vector.broadcast %cst_11 : f32 to vector<1x4xf32>
    %30 = arith.addf %29, %28 : vector<1x4xf32>
    %31 = arith.divf %29, %30 : vector<1x4xf32>
    %cst_12 = arith.constant 0.000000e+00 : f32
    %32 = vector.broadcast %cst_12 : f32 to vector<1x256xf32>
    %cst_13 = arith.constant 0xFF800000 : f32
    %33 = vector.broadcast %cst_13 : f32 to vector<1x256xf32>
    %c0_14 = arith.constant 0 : index
    %c0_15 = arith.constant 0 : index
    %c0_16 = arith.constant 0 : index
    %34 = vector.load %arg1[%c0_14, %c0_15, %c0_16] : memref<1x4x256xf32, #tpu.memory_space<vmem>>, vector<1x4x256xf32>
    %35 = vector.shape_cast %31 : vector<1x4xf32> to vector<1x4x1xf32>
    %36 = vector.broadcast %35 : vector<1x4x1xf32> to vector<1x4x256xf32>
    %37 = arith.mulf %34, %36 : vector<1x4x256xf32>
    %cst_17 = arith.constant dense<0.000000e+00> : vector<1x256xf32>
    %38 = vector.multi_reduction <add>, %37, %cst_17 [1] : vector<1x4x256xf32> to vector<1x256xf32>
    %39 = arith.addf %32, %38 : vector<1x256xf32>
    %cst_18 = arith.constant dense<0xFF800000> : vector<1x256xf32>
    %40 = vector.multi_reduction <maximumf>, %37, %cst_18 [1] : vector<1x4x256xf32> to vector<1x256xf32>
    %41 = arith.maximumf %33, %40 : vector<1x256xf32>
    %cst_19 = arith.constant 2.500000e-01 : f32
    %42 = vector.broadcast %cst_19 : f32 to vector<1x256xf32>
    %43 = arith.mulf %39, %42 : vector<1x256xf32>
    %c0_i32 = arith.constant 0 : i32
    %44 = arith.sitofp %c0_i32 : i32 to f32
    %45 = vector.broadcast %44 : f32 to vector<1x51xf32>
    %46 = tpu.concatenate %45, %43 in 1 : vector<1x51xf32>, vector<1x256xf32> -> vector<1x307xf32>
    %47 = vector.broadcast %44 : f32 to vector<1x51xf32>
    %48 = tpu.concatenate %46, %47 in 1 : vector<1x307xf32>, vector<1x51xf32> -> vector<1x358xf32>
    %c0_i32_20 = arith.constant 0 : i32
    %49 = arith.sitofp %c0_i32_20 : i32 to f32
    %50 = vector.broadcast %49 : f32 to vector<1x51xf32>
    %51 = tpu.concatenate %50, %41 in 1 : vector<1x51xf32>, vector<1x256xf32> -> vector<1x307xf32>
    %52 = vector.broadcast %49 : f32 to vector<1x51xf32>
    %53 = tpu.concatenate %51, %52 in 1 : vector<1x307xf32>, vector<1x51xf32> -> vector<1x358xf32>
    %54 = tpu.iota {dimensions = array<i32: 1>} : vector<1x256xi32>
    %c16_i32 = arith.constant 16 : i32
    %c0_i32_21 = arith.constant 0 : i32
    %55 = arith.cmpi eq, %c16_i32, %c0_i32_21 : i32
    %c1_i32 = arith.constant 1 : i32
    %56 = arith.select %55, %c1_i32, %c16_i32 : i32
    %57 = vector.broadcast %56 : i32 to vector<1x256xi32>
    %58 = arith.remsi %54, %57 : vector<1x256xi32>
    %c0_i32_22 = arith.constant 0 : i32
    %59 = vector.broadcast %c0_i32_22 : i32 to vector<1x256xi32>
    %60 = arith.cmpi ne, %58, %59 : vector<1x256xi32>
    %c0_i32_23 = arith.constant 0 : i32
    %61 = vector.broadcast %c0_i32_23 : i32 to vector<1x256xi32>
    %62 = arith.cmpi slt, %58, %61 : vector<1x256xi32>
    %c0_i32_24 = arith.constant 0 : i32
    %63 = arith.cmpi slt, %56, %c0_i32_24 : i32
    %64 = vector.broadcast %63 : i1 to vector<1x256xi1>
    %65 = vector.broadcast %64 : vector<1x256xi1> to vector<1x256xi1>
    %66 = arith.xori %62, %65 : vector<1x256xi1>
    %67 = arith.andi %66, %60 : vector<1x256xi1>
    %68 = vector.broadcast %56 : i32 to vector<1x256xi32>
    %69 = arith.addi %58, %68 : vector<1x256xi32>
    %70 = arith.select %67, %69, %58 : vector<1x256xi1>, vector<1x256xi32>
    %cst_25 = arith.constant 0.000000e+00 : f32
    %71 = vector.broadcast %cst_25 : f32 to vector<1x256xf32>
    %c-3_i32 = arith.constant -3 : i32
    %72 = vector.broadcast %c-3_i32 : i32 to vector<1x256xi32>
    %73 = arith.addi %70, %72 : vector<1x256xi32>
    %c0_i32_26 = arith.constant 0 : i32
    %74 = vector.broadcast %c0_i32_26 : i32 to vector<1x256xi32>
    %75 = arith.cmpi sge, %73, %74 : vector<1x256xi32>
    %c-3_i32_27 = arith.constant -3 : i32
    %76 = vector.broadcast %c-3_i32_27 : i32 to vector<1x256xi32>
    %77 = arith.addi %70, %76 : vector<1x256xi32>
    %c16_i32_28 = arith.constant 16 : i32
    %78 = vector.broadcast %c16_i32_28 : i32 to vector<1x256xi32>
    %79 = arith.cmpi slt, %77, %78 : vector<1x256xi32>
    %80 = arith.andi %75, %79 : vector<1x256xi1>
    %cst_29 = arith.constant 0.000000e+00 : f32
    %81 = vector.broadcast %cst_29 : f32 to vector<1x256xf32>
    %c0_30 = arith.constant 0 : index
    %82 = memref.load %arg4[%c0_30] : memref<98xf32, #tpu.memory_space<smem>>
    %c49 = arith.constant 49 : index
    %83 = memref.load %arg4[%c49] : memref<98xf32, #tpu.memory_space<smem>>
    %84 = vector.extract_strided_slice %48 {offsets = [0, 0], sizes = [1, 256], strides = [1, 1]} : vector<1x358xf32> to vector<1x256xf32>
    %85 = vector.broadcast %82 : f32 to vector<1x256xf32>
    %86 = arith.mulf %85, %84 : vector<1x256xf32>
    %87 = arith.addf %81, %86 : vector<1x256xf32>
    %88 = vector.extract_strided_slice %53 {offsets = [0, 0], sizes = [1, 256], strides = [1, 1]} : vector<1x358xf32> to vector<1x256xf32>
    %89 = vector.broadcast %83 : f32 to vector<1x256xf32>
    %90 = arith.mulf %89, %88 : vector<1x256xf32>
    %91 = arith.addf %87, %90 : vector<1x256xf32>
    %c7 = arith.constant 7 : index
    %92 = memref.load %arg4[%c7] : memref<98xf32, #tpu.memory_space<smem>>
    %c56 = arith.constant 56 : index
    %93 = memref.load %arg4[%c56] : memref<98xf32, #tpu.memory_space<smem>>
    %94 = vector.extract_strided_slice %48 {offsets = [0, 16], sizes = [1, 256], strides = [1, 1]} : vector<1x358xf32> to vector<1x256xf32>
    %95 = vector.broadcast %92 : f32 to vector<1x256xf32>
    %96 = arith.mulf %95, %94 : vector<1x256xf32>
    %97 = arith.addf %91, %96 : vector<1x256xf32>
    %98 = vector.extract_strided_slice %53 {offsets = [0, 16], sizes = [1, 256], strides = [1, 1]} : vector<1x358xf32> to vector<1x256xf32>
    %99 = vector.broadcast %93 : f32 to vector<1x256xf32>
    %100 = arith.mulf %99, %98 : vector<1x256xf32>
    %101 = arith.addf %97, %100 : vector<1x256xf32>
    %c14 = arith.constant 14 : index
    %102 = memref.load %arg4[%c14] : memref<98xf32, #tpu.memory_space<smem>>
    %c63 = arith.constant 63 : index
    %103 = memref.load %arg4[%c63] : memref<98xf32, #tpu.memory_space<smem>>
    %104 = vector.extract_strided_slice %48 {offsets = [0, 32], sizes = [1, 256], strides = [1, 1]} : vector<1x358xf32> to vector<1x256xf32>
    %105 = vector.broadcast %102 : f32 to vector<1x256xf32>
    %106 = arith.mulf %105, %104 : vector<1x256xf32>
    %107 = arith.addf %101, %106 : vector<1x256xf32>
    %108 = vector.extract_strided_slice %53 {offsets = [0, 32], sizes = [1, 256], strides = [1, 1]} : vector<1x358xf32> to vector<1x256xf32>
    %109 = vector.broadcast %103 : f32 to vector<1x256xf32>
    %110 = arith.mulf %109, %108 : vector<1x256xf32>
    %111 = arith.addf %107, %110 : vector<1x256xf32>
    %c21 = arith.constant 21 : index
    %112 = memref.load %arg4[%c21] : memref<98xf32, #tpu.memory_space<smem>>
    %c70 = arith.constant 70 : index
    %113 = memref.load %arg4[%c70] : memref<98xf32, #tpu.memory_space<smem>>
    %114 = vector.extract_strided_slice %48 {offsets = [0, 48], sizes = [1, 256], strides = [1, 1]} : vector<1x358xf32> to vector<1x256xf32>
    %115 = vector.broadcast %112 : f32 to vector<1x256xf32>
    %116 = arith.mulf %115, %114 : vector<1x256xf32>
    %117 = arith.addf %111, %116 : vector<1x256xf32>
    %118 = vector.extract_strided_slice %53 {offsets = [0, 48], sizes = [1, 256], strides = [1, 1]} : vector<1x358xf32> to vector<1x256xf32>
    %119 = vector.broadcast %113 : f32 to vector<1x256xf32>
    %120 = arith.mulf %119, %118 : vector<1x256xf32>
    %121 = arith.addf %117, %120 : vector<1x256xf32>
    %c28 = arith.constant 28 : index
    %122 = memref.load %arg4[%c28] : memref<98xf32, #tpu.memory_space<smem>>
    %c77 = arith.constant 77 : index
    %123 = memref.load %arg4[%c77] : memref<98xf32, #tpu.memory_space<smem>>
    %124 = vector.extract_strided_slice %48 {offsets = [0, 64], sizes = [1, 256], strides = [1, 1]} : vector<1x358xf32> to vector<1x256xf32>
    %125 = vector.broadcast %122 : f32 to vector<1x256xf32>
    %126 = arith.mulf %125, %124 : vector<1x256xf32>
    %127 = arith.addf %121, %126 : vector<1x256xf32>
    %128 = vector.extract_strided_slice %53 {offsets = [0, 64], sizes = [1, 256], strides = [1, 1]} : vector<1x358xf32> to vector<1x256xf32>
    %129 = vector.broadcast %123 : f32 to vector<1x256xf32>
    %130 = arith.mulf %129, %128 : vector<1x256xf32>
    %131 = arith.addf %127, %130 : vector<1x256xf32>
    %c35 = arith.constant 35 : index
    %132 = memref.load %arg4[%c35] : memref<98xf32, #tpu.memory_space<smem>>
    %c84 = arith.constant 84 : index
    %133 = memref.load %arg4[%c84] : memref<98xf32, #tpu.memory_space<smem>>
    %134 = vector.extract_strided_slice %48 {offsets = [0, 80], sizes = [1, 256], strides = [1, 1]} : vector<1x358xf32> to vector<1x256xf32>
    %135 = vector.broadcast %132 : f32 to vector<1x256xf32>
    %136 = arith.mulf %135, %134 : vector<1x256xf32>
    %137 = arith.addf %131, %136 : vector<1x256xf32>
    %138 = vector.extract_strided_slice %53 {offsets = [0, 80], sizes = [1, 256], strides = [1, 1]} : vector<1x358xf32> to vector<1x256xf32>
    %139 = vector.broadcast %133 : f32 to vector<1x256xf32>
    %140 = arith.mulf %139, %138 : vector<1x256xf32>
    %141 = arith.addf %137, %140 : vector<1x256xf32>
    %c42 = arith.constant 42 : index
    %142 = memref.load %arg4[%c42] : memref<98xf32, #tpu.memory_space<smem>>
    %c91 = arith.constant 91 : index
    %143 = memref.load %arg4[%c91] : memref<98xf32, #tpu.memory_space<smem>>
    %144 = vector.extract_strided_slice %48 {offsets = [0, 96], sizes = [1, 256], strides = [1, 1]} : vector<1x358xf32> to vector<1x256xf32>
    %145 = vector.broadcast %142 : f32 to vector<1x256xf32>
    %146 = arith.mulf %145, %144 : vector<1x256xf32>
    %147 = arith.addf %141, %146 : vector<1x256xf32>
    %148 = vector.extract_strided_slice %53 {offsets = [0, 96], sizes = [1, 256], strides = [1, 1]} : vector<1x358xf32> to vector<1x256xf32>
    %149 = vector.broadcast %143 : f32 to vector<1x256xf32>
    %150 = arith.mulf %149, %148 : vector<1x256xf32>
    %151 = arith.addf %147, %150 : vector<1x256xf32>
    %cst_31 = arith.constant 0.000000e+00 : f32
    %152 = vector.broadcast %cst_31 : f32 to vector<1x256xf32>
    %153 = arith.select %80, %151, %152 : vector<1x256xi1>, vector<1x256xf32>
    %154 = arith.addf %71, %153 : vector<1x256xf32>
    %c-2_i32 = arith.constant -2 : i32
    %155 = vector.broadcast %c-2_i32 : i32 to vector<1x256xi32>
    %156 = arith.addi %70, %155 : vector<1x256xi32>
    %c0_i32_32 = arith.constant 0 : i32
    %157 = vector.broadcast %c0_i32_32 : i32 to vector<1x256xi32>
    %158 = arith.cmpi sge, %156, %157 : vector<1x256xi32>
    %c-2_i32_33 = arith.constant -2 : i32
    %159 = vector.broadcast %c-2_i32_33 : i32 to vector<1x256xi32>
    %160 = arith.addi %70, %159 : vector<1x256xi32>
    %c16_i32_34 = arith.constant 16 : i32
    %161 = vector.broadcast %c16_i32_34 : i32 to vector<1x256xi32>
    %162 = arith.cmpi slt, %160, %161 : vector<1x256xi32>
    %163 = arith.andi %158, %162 : vector<1x256xi1>
    %cst_35 = arith.constant 0.000000e+00 : f32
    %164 = vector.broadcast %cst_35 : f32 to vector<1x256xf32>
    %c1_36 = arith.constant 1 : index
    %165 = memref.load %arg4[%c1_36] : memref<98xf32, #tpu.memory_space<smem>>
    %c50 = arith.constant 50 : index
    %166 = memref.load %arg4[%c50] : memref<98xf32, #tpu.memory_space<smem>>
    %167 = vector.extract_strided_slice %48 {offsets = [0, 1], sizes = [1, 256], strides = [1, 1]} : vector<1x358xf32> to vector<1x256xf32>
    %168 = vector.broadcast %165 : f32 to vector<1x256xf32>
    %169 = arith.mulf %168, %167 : vector<1x256xf32>
    %170 = arith.addf %164, %169 : vector<1x256xf32>
    %171 = vector.extract_strided_slice %53 {offsets = [0, 1], sizes = [1, 256], strides = [1, 1]} : vector<1x358xf32> to vector<1x256xf32>
    %172 = vector.broadcast %166 : f32 to vector<1x256xf32>
    %173 = arith.mulf %172, %171 : vector<1x256xf32>
    %174 = arith.addf %170, %173 : vector<1x256xf32>
    %c8 = arith.constant 8 : index
    %175 = memref.load %arg4[%c8] : memref<98xf32, #tpu.memory_space<smem>>
    %c57 = arith.constant 57 : index
    %176 = memref.load %arg4[%c57] : memref<98xf32, #tpu.memory_space<smem>>
    %177 = vector.extract_strided_slice %48 {offsets = [0, 17], sizes = [1, 256], strides = [1, 1]} : vector<1x358xf32> to vector<1x256xf32>
    %178 = vector.broadcast %175 : f32 to vector<1x256xf32>
    %179 = arith.mulf %178, %177 : vector<1x256xf32>
    %180 = arith.addf %174, %179 : vector<1x256xf32>
    %181 = vector.extract_strided_slice %53 {offsets = [0, 17], sizes = [1, 256], strides = [1, 1]} : vector<1x358xf32> to vector<1x256xf32>
    %182 = vector.broadcast %176 : f32 to vector<1x256xf32>
    %183 = arith.mulf %182, %181 : vector<1x256xf32>
    %184 = arith.addf %180, %183 : vector<1x256xf32>
    %c15 = arith.constant 15 : index
    %185 = memref.load %arg4[%c15] : memref<98xf32, #tpu.memory_space<smem>>
    %c64 = arith.constant 64 : index
    %186 = memref.load %arg4[%c64] : memref<98xf32, #tpu.memory_space<smem>>
    %187 = vector.extract_strided_slice %48 {offsets = [0, 33], sizes = [1, 256], strides = [1, 1]} : vector<1x358xf32> to vector<1x256xf32>
    %188 = vector.broadcast %185 : f32 to vector<1x256xf32>
    %189 = arith.mulf %188, %187 : vector<1x256xf32>
    %190 = arith.addf %184, %189 : vector<1x256xf32>
    %191 = vector.extract_strided_slice %53 {offsets = [0, 33], sizes = [1, 256], strides = [1, 1]} : vector<1x358xf32> to vector<1x256xf32>
    %192 = vector.broadcast %186 : f32 to vector<1x256xf32>
    %193 = arith.mulf %192, %191 : vector<1x256xf32>
    %194 = arith.addf %190, %193 : vector<1x256xf32>
    %c22 = arith.constant 22 : index
    %195 = memref.load %arg4[%c22] : memref<98xf32, #tpu.memory_space<smem>>
    %c71 = arith.constant 71 : index
    %196 = memref.load %arg4[%c71] : memref<98xf32, #tpu.memory_space<smem>>
    %197 = vector.extract_strided_slice %48 {offsets = [0, 49], sizes = [1, 256], strides = [1, 1]} : vector<1x358xf32> to vector<1x256xf32>
    %198 = vector.broadcast %195 : f32 to vector<1x256xf32>
    %199 = arith.mulf %198, %197 : vector<1x256xf32>
    %200 = arith.addf %194, %199 : vector<1x256xf32>
    %201 = vector.extract_strided_slice %53 {offsets = [0, 49], sizes = [1, 256], strides = [1, 1]} : vector<1x358xf32> to vector<1x256xf32>
    %202 = vector.broadcast %196 : f32 to vector<1x256xf32>
    %203 = arith.mulf %202, %201 : vector<1x256xf32>
    %204 = arith.addf %200, %203 : vector<1x256xf32>
    %c29 = arith.constant 29 : index
    %205 = memref.load %arg4[%c29] : memref<98xf32, #tpu.memory_space<smem>>
    %c78 = arith.constant 78 : index
    %206 = memref.load %arg4[%c78] : memref<98xf32, #tpu.memory_space<smem>>
    %207 = vector.extract_strided_slice %48 {offsets = [0, 65], sizes = [1, 256], strides = [1, 1]} : vector<1x358xf32> to vector<1x256xf32>
    %208 = vector.broadcast %205 : f32 to vector<1x256xf32>
    %209 = arith.mulf %208, %207 : vector<1x256xf32>
    %210 = arith.addf %204, %209 : vector<1x256xf32>
    %211 = vector.extract_strided_slice %53 {offsets = [0, 65], sizes = [1, 256], strides = [1, 1]} : vector<1x358xf32> to vector<1x256xf32>
    %212 = vector.broadcast %206 : f32 to vector<1x256xf32>
    %213 = arith.mulf %212, %211 : vector<1x256xf32>
    %214 = arith.addf %210, %213 : vector<1x256xf32>
    %c36 = arith.constant 36 : index
    %215 = memref.load %arg4[%c36] : memref<98xf32, #tpu.memory_space<smem>>
    %c85 = arith.constant 85 : index
    %216 = memref.load %arg4[%c85] : memref<98xf32, #tpu.memory_space<smem>>
    %217 = vector.extract_strided_slice %48 {offsets = [0, 81], sizes = [1, 256], strides = [1, 1]} : vector<1x358xf32> to vector<1x256xf32>
    %218 = vector.broadcast %215 : f32 to vector<1x256xf32>
    %219 = arith.mulf %218, %217 : vector<1x256xf32>
    %220 = arith.addf %214, %219 : vector<1x256xf32>
    %221 = vector.extract_strided_slice %53 {offsets = [0, 81], sizes = [1, 256], strides = [1, 1]} : vector<1x358xf32> to vector<1x256xf32>
    %222 = vector.broadcast %216 : f32 to vector<1x256xf32>
    %223 = arith.mulf %222, %221 : vector<1x256xf32>
    %224 = arith.addf %220, %223 : vector<1x256xf32>
    %c43 = arith.constant 43 : index
    %225 = memref.load %arg4[%c43] : memref<98xf32, #tpu.memory_space<smem>>
    %c92 = arith.constant 92 : index
    %226 = memref.load %arg4[%c92] : memref<98xf32, #tpu.memory_space<smem>>
    %227 = vector.extract_strided_slice %48 {offsets = [0, 97], sizes = [1, 256], strides = [1, 1]} : vector<1x358xf32> to vector<1x256xf32>
    %228 = vector.broadcast %225 : f32 to vector<1x256xf32>
    %229 = arith.mulf %228, %227 : vector<1x256xf32>
    %230 = arith.addf %224, %229 : vector<1x256xf32>
    %231 = vector.extract_strided_slice %53 {offsets = [0, 97], sizes = [1, 256], strides = [1, 1]} : vector<1x358xf32> to vector<1x256xf32>
    %232 = vector.broadcast %226 : f32 to vector<1x256xf32>
    %233 = arith.mulf %232, %231 : vector<1x256xf32>
    %234 = arith.addf %230, %233 : vector<1x256xf32>
    %cst_37 = arith.constant 0.000000e+00 : f32
    %235 = vector.broadcast %cst_37 : f32 to vector<1x256xf32>
    %236 = arith.select %163, %234, %235 : vector<1x256xi1>, vector<1x256xf32>
    %237 = arith.addf %154, %236 : vector<1x256xf32>
    %c-1_i32 = arith.constant -1 : i32
    %238 = vector.broadcast %c-1_i32 : i32 to vector<1x256xi32>
    %239 = arith.addi %70, %238 : vector<1x256xi32>
    %c0_i32_38 = arith.constant 0 : i32
    %240 = vector.broadcast %c0_i32_38 : i32 to vector<1x256xi32>
    %241 = arith.cmpi sge, %239, %240 : vector<1x256xi32>
    %c-1_i32_39 = arith.constant -1 : i32
    %242 = vector.broadcast %c-1_i32_39 : i32 to vector<1x256xi32>
    %243 = arith.addi %70, %242 : vector<1x256xi32>
    %c16_i32_40 = arith.constant 16 : i32
    %244 = vector.broadcast %c16_i32_40 : i32 to vector<1x256xi32>
    %245 = arith.cmpi slt, %243, %244 : vector<1x256xi32>
    %246 = arith.andi %241, %245 : vector<1x256xi1>
    %cst_41 = arith.constant 0.000000e+00 : f32
    %247 = vector.broadcast %cst_41 : f32 to vector<1x256xf32>
    %c2_42 = arith.constant 2 : index
    %248 = memref.load %arg4[%c2_42] : memref<98xf32, #tpu.memory_space<smem>>
    %c51 = arith.constant 51 : index
    %249 = memref.load %arg4[%c51] : memref<98xf32, #tpu.memory_space<smem>>
    %250 = vector.extract_strided_slice %48 {offsets = [0, 2], sizes = [1, 256], strides = [1, 1]} : vector<1x358xf32> to vector<1x256xf32>
    %251 = vector.broadcast %248 : f32 to vector<1x256xf32>
    %252 = arith.mulf %251, %250 : vector<1x256xf32>
    %253 = arith.addf %247, %252 : vector<1x256xf32>
    %254 = vector.extract_strided_slice %53 {offsets = [0, 2], sizes = [1, 256], strides = [1, 1]} : vector<1x358xf32> to vector<1x256xf32>
    %255 = vector.broadcast %249 : f32 to vector<1x256xf32>
    %256 = arith.mulf %255, %254 : vector<1x256xf32>
    %257 = arith.addf %253, %256 : vector<1x256xf32>
    %c9 = arith.constant 9 : index
    %258 = memref.load %arg4[%c9] : memref<98xf32, #tpu.memory_space<smem>>
    %c58 = arith.constant 58 : index
    %259 = memref.load %arg4[%c58] : memref<98xf32, #tpu.memory_space<smem>>
    %260 = vector.extract_strided_slice %48 {offsets = [0, 18], sizes = [1, 256], strides = [1, 1]} : vector<1x358xf32> to vector<1x256xf32>
    %261 = vector.broadcast %258 : f32 to vector<1x256xf32>
    %262 = arith.mulf %261, %260 : vector<1x256xf32>
    %263 = arith.addf %257, %262 : vector<1x256xf32>
    %264 = vector.extract_strided_slice %53 {offsets = [0, 18], sizes = [1, 256], strides = [1, 1]} : vector<1x358xf32> to vector<1x256xf32>
    %265 = vector.broadcast %259 : f32 to vector<1x256xf32>
    %266 = arith.mulf %265, %264 : vector<1x256xf32>
    %267 = arith.addf %263, %266 : vector<1x256xf32>
    %c16 = arith.constant 16 : index
    %268 = memref.load %arg4[%c16] : memref<98xf32, #tpu.memory_space<smem>>
    %c65 = arith.constant 65 : index
    %269 = memref.load %arg4[%c65] : memref<98xf32, #tpu.memory_space<smem>>
    %270 = vector.extract_strided_slice %48 {offsets = [0, 34], sizes = [1, 256], strides = [1, 1]} : vector<1x358xf32> to vector<1x256xf32>
    %271 = vector.broadcast %268 : f32 to vector<1x256xf32>
    %272 = arith.mulf %271, %270 : vector<1x256xf32>
    %273 = arith.addf %267, %272 : vector<1x256xf32>
    %274 = vector.extract_strided_slice %53 {offsets = [0, 34], sizes = [1, 256], strides = [1, 1]} : vector<1x358xf32> to vector<1x256xf32>
    %275 = vector.broadcast %269 : f32 to vector<1x256xf32>
    %276 = arith.mulf %275, %274 : vector<1x256xf32>
    %277 = arith.addf %273, %276 : vector<1x256xf32>
    %c23 = arith.constant 23 : index
    %278 = memref.load %arg4[%c23] : memref<98xf32, #tpu.memory_space<smem>>
    %c72 = arith.constant 72 : index
    %279 = memref.load %arg4[%c72] : memref<98xf32, #tpu.memory_space<smem>>
    %280 = vector.extract_strided_slice %48 {offsets = [0, 50], sizes = [1, 256], strides = [1, 1]} : vector<1x358xf32> to vector<1x256xf32>
    %281 = vector.broadcast %278 : f32 to vector<1x256xf32>
    %282 = arith.mulf %281, %280 : vector<1x256xf32>
    %283 = arith.addf %277, %282 : vector<1x256xf32>
    %284 = vector.extract_strided_slice %53 {offsets = [0, 50], sizes = [1, 256], strides = [1, 1]} : vector<1x358xf32> to vector<1x256xf32>
    %285 = vector.broadcast %279 : f32 to vector<1x256xf32>
    %286 = arith.mulf %285, %284 : vector<1x256xf32>
    %287 = arith.addf %283, %286 : vector<1x256xf32>
    %c30 = arith.constant 30 : index
    %288 = memref.load %arg4[%c30] : memref<98xf32, #tpu.memory_space<smem>>
    %c79 = arith.constant 79 : index
    %289 = memref.load %arg4[%c79] : memref<98xf32, #tpu.memory_space<smem>>
    %290 = vector.extract_strided_slice %48 {offsets = [0, 66], sizes = [1, 256], strides = [1, 1]} : vector<1x358xf32> to vector<1x256xf32>
    %291 = vector.broadcast %288 : f32 to vector<1x256xf32>
    %292 = arith.mulf %291, %290 : vector<1x256xf32>
    %293 = arith.addf %287, %292 : vector<1x256xf32>
    %294 = vector.extract_strided_slice %53 {offsets = [0, 66], sizes = [1, 256], strides = [1, 1]} : vector<1x358xf32> to vector<1x256xf32>
    %295 = vector.broadcast %289 : f32 to vector<1x256xf32>
    %296 = arith.mulf %295, %294 : vector<1x256xf32>
    %297 = arith.addf %293, %296 : vector<1x256xf32>
    %c37 = arith.constant 37 : index
    %298 = memref.load %arg4[%c37] : memref<98xf32, #tpu.memory_space<smem>>
    %c86 = arith.constant 86 : index
    %299 = memref.load %arg4[%c86] : memref<98xf32, #tpu.memory_space<smem>>
    %300 = vector.extract_strided_slice %48 {offsets = [0, 82], sizes = [1, 256], strides = [1, 1]} : vector<1x358xf32> to vector<1x256xf32>
    %301 = vector.broadcast %298 : f32 to vector<1x256xf32>
    %302 = arith.mulf %301, %300 : vector<1x256xf32>
    %303 = arith.addf %297, %302 : vector<1x256xf32>
    %304 = vector.extract_strided_slice %53 {offsets = [0, 82], sizes = [1, 256], strides = [1, 1]} : vector<1x358xf32> to vector<1x256xf32>
    %305 = vector.broadcast %299 : f32 to vector<1x256xf32>
    %306 = arith.mulf %305, %304 : vector<1x256xf32>
    %307 = arith.addf %303, %306 : vector<1x256xf32>
    %c44 = arith.constant 44 : index
    %308 = memref.load %arg4[%c44] : memref<98xf32, #tpu.memory_space<smem>>
    %c93 = arith.constant 93 : index
    %309 = memref.load %arg4[%c93] : memref<98xf32, #tpu.memory_space<smem>>
    %310 = vector.extract_strided_slice %48 {offsets = [0, 98], sizes = [1, 256], strides = [1, 1]} : vector<1x358xf32> to vector<1x256xf32>
    %311 = vector.broadcast %308 : f32 to vector<1x256xf32>
    %312 = arith.mulf %311, %310 : vector<1x256xf32>
    %313 = arith.addf %307, %312 : vector<1x256xf32>
    %314 = vector.extract_strided_slice %53 {offsets = [0, 98], sizes = [1, 256], strides = [1, 1]} : vector<1x358xf32> to vector<1x256xf32>
    %315 = vector.broadcast %309 : f32 to vector<1x256xf32>
    %316 = arith.mulf %315, %314 : vector<1x256xf32>
    %317 = arith.addf %313, %316 : vector<1x256xf32>
    %cst_43 = arith.constant 0.000000e+00 : f32
    %318 = vector.broadcast %cst_43 : f32 to vector<1x256xf32>
    %319 = arith.select %246, %317, %318 : vector<1x256xi1>, vector<1x256xf32>
    %320 = arith.addf %237, %319 : vector<1x256xf32>
    %c0_i32_44 = arith.constant 0 : i32
    %321 = vector.broadcast %c0_i32_44 : i32 to vector<1x256xi32>
    %322 = arith.addi %70, %321 : vector<1x256xi32>
    %c0_i32_45 = arith.constant 0 : i32
    %323 = vector.broadcast %c0_i32_45 : i32 to vector<1x256xi32>
    %324 = arith.cmpi sge, %322, %323 : vector<1x256xi32>
    %c0_i32_46 = arith.constant 0 : i32
    %325 = vector.broadcast %c0_i32_46 : i32 to vector<1x256xi32>
    %326 = arith.addi %70, %325 : vector<1x256xi32>
    %c16_i32_47 = arith.constant 16 : i32
    %327 = vector.broadcast %c16_i32_47 : i32 to vector<1x256xi32>
    %328 = arith.cmpi slt, %326, %327 : vector<1x256xi32>
    %329 = arith.andi %324, %328 : vector<1x256xi1>
    %cst_48 = arith.constant 0.000000e+00 : f32
    %330 = vector.broadcast %cst_48 : f32 to vector<1x256xf32>
    %c3_49 = arith.constant 3 : index
    %331 = memref.load %arg4[%c3_49] : memref<98xf32, #tpu.memory_space<smem>>
    %c52 = arith.constant 52 : index
    %332 = memref.load %arg4[%c52] : memref<98xf32, #tpu.memory_space<smem>>
    %333 = vector.extract_strided_slice %48 {offsets = [0, 3], sizes = [1, 256], strides = [1, 1]} : vector<1x358xf32> to vector<1x256xf32>
    %334 = vector.broadcast %331 : f32 to vector<1x256xf32>
    %335 = arith.mulf %334, %333 : vector<1x256xf32>
    %336 = arith.addf %330, %335 : vector<1x256xf32>
    %337 = vector.extract_strided_slice %53 {offsets = [0, 3], sizes = [1, 256], strides = [1, 1]} : vector<1x358xf32> to vector<1x256xf32>
    %338 = vector.broadcast %332 : f32 to vector<1x256xf32>
    %339 = arith.mulf %338, %337 : vector<1x256xf32>
    %340 = arith.addf %336, %339 : vector<1x256xf32>
    %c10 = arith.constant 10 : index
    %341 = memref.load %arg4[%c10] : memref<98xf32, #tpu.memory_space<smem>>
    %c59 = arith.constant 59 : index
    %342 = memref.load %arg4[%c59] : memref<98xf32, #tpu.memory_space<smem>>
    %343 = vector.extract_strided_slice %48 {offsets = [0, 19], sizes = [1, 256], strides = [1, 1]} : vector<1x358xf32> to vector<1x256xf32>
    %344 = vector.broadcast %341 : f32 to vector<1x256xf32>
    %345 = arith.mulf %344, %343 : vector<1x256xf32>
    %346 = arith.addf %340, %345 : vector<1x256xf32>
    %347 = vector.extract_strided_slice %53 {offsets = [0, 19], sizes = [1, 256], strides = [1, 1]} : vector<1x358xf32> to vector<1x256xf32>
    %348 = vector.broadcast %342 : f32 to vector<1x256xf32>
    %349 = arith.mulf %348, %347 : vector<1x256xf32>
    %350 = arith.addf %346, %349 : vector<1x256xf32>
    %c17 = arith.constant 17 : index
    %351 = memref.load %arg4[%c17] : memref<98xf32, #tpu.memory_space<smem>>
    %c66 = arith.constant 66 : index
    %352 = memref.load %arg4[%c66] : memref<98xf32, #tpu.memory_space<smem>>
    %353 = vector.extract_strided_slice %48 {offsets = [0, 35], sizes = [1, 256], strides = [1, 1]} : vector<1x358xf32> to vector<1x256xf32>
    %354 = vector.broadcast %351 : f32 to vector<1x256xf32>
    %355 = arith.mulf %354, %353 : vector<1x256xf32>
    %356 = arith.addf %350, %355 : vector<1x256xf32>
    %357 = vector.extract_strided_slice %53 {offsets = [0, 35], sizes = [1, 256], strides = [1, 1]} : vector<1x358xf32> to vector<1x256xf32>
    %358 = vector.broadcast %352 : f32 to vector<1x256xf32>
    %359 = arith.mulf %358, %357 : vector<1x256xf32>
    %360 = arith.addf %356, %359 : vector<1x256xf32>
    %c24 = arith.constant 24 : index
    %361 = memref.load %arg4[%c24] : memref<98xf32, #tpu.memory_space<smem>>
    %c73 = arith.constant 73 : index
    %362 = memref.load %arg4[%c73] : memref<98xf32, #tpu.memory_space<smem>>
    %363 = vector.extract_strided_slice %48 {offsets = [0, 51], sizes = [1, 256], strides = [1, 1]} : vector<1x358xf32> to vector<1x256xf32>
    %364 = vector.broadcast %361 : f32 to vector<1x256xf32>
    %365 = arith.mulf %364, %363 : vector<1x256xf32>
    %366 = arith.addf %360, %365 : vector<1x256xf32>
    %367 = vector.extract_strided_slice %53 {offsets = [0, 51], sizes = [1, 256], strides = [1, 1]} : vector<1x358xf32> to vector<1x256xf32>
    %368 = vector.broadcast %362 : f32 to vector<1x256xf32>
    %369 = arith.mulf %368, %367 : vector<1x256xf32>
    %370 = arith.addf %366, %369 : vector<1x256xf32>
    %c31 = arith.constant 31 : index
    %371 = memref.load %arg4[%c31] : memref<98xf32, #tpu.memory_space<smem>>
    %c80 = arith.constant 80 : index
    %372 = memref.load %arg4[%c80] : memref<98xf32, #tpu.memory_space<smem>>
    %373 = vector.extract_strided_slice %48 {offsets = [0, 67], sizes = [1, 256], strides = [1, 1]} : vector<1x358xf32> to vector<1x256xf32>
    %374 = vector.broadcast %371 : f32 to vector<1x256xf32>
    %375 = arith.mulf %374, %373 : vector<1x256xf32>
    %376 = arith.addf %370, %375 : vector<1x256xf32>
    %377 = vector.extract_strided_slice %53 {offsets = [0, 67], sizes = [1, 256], strides = [1, 1]} : vector<1x358xf32> to vector<1x256xf32>
    %378 = vector.broadcast %372 : f32 to vector<1x256xf32>
    %379 = arith.mulf %378, %377 : vector<1x256xf32>
    %380 = arith.addf %376, %379 : vector<1x256xf32>
    %c38 = arith.constant 38 : index
    %381 = memref.load %arg4[%c38] : memref<98xf32, #tpu.memory_space<smem>>
    %c87 = arith.constant 87 : index
    %382 = memref.load %arg4[%c87] : memref<98xf32, #tpu.memory_space<smem>>
    %383 = vector.extract_strided_slice %48 {offsets = [0, 83], sizes = [1, 256], strides = [1, 1]} : vector<1x358xf32> to vector<1x256xf32>
    %384 = vector.broadcast %381 : f32 to vector<1x256xf32>
    %385 = arith.mulf %384, %383 : vector<1x256xf32>
    %386 = arith.addf %380, %385 : vector<1x256xf32>
    %387 = vector.extract_strided_slice %53 {offsets = [0, 83], sizes = [1, 256], strides = [1, 1]} : vector<1x358xf32> to vector<1x256xf32>
    %388 = vector.broadcast %382 : f32 to vector<1x256xf32>
    %389 = arith.mulf %388, %387 : vector<1x256xf32>
    %390 = arith.addf %386, %389 : vector<1x256xf32>
    %c45 = arith.constant 45 : index
    %391 = memref.load %arg4[%c45] : memref<98xf32, #tpu.memory_space<smem>>
    %c94 = arith.constant 94 : index
    %392 = memref.load %arg4[%c94] : memref<98xf32, #tpu.memory_space<smem>>
    %393 = vector.extract_strided_slice %48 {offsets = [0, 99], sizes = [1, 256], strides = [1, 1]} : vector<1x358xf32> to vector<1x256xf32>
    %394 = vector.broadcast %391 : f32 to vector<1x256xf32>
    %395 = arith.mulf %394, %393 : vector<1x256xf32>
    %396 = arith.addf %390, %395 : vector<1x256xf32>
    %397 = vector.extract_strided_slice %53 {offsets = [0, 99], sizes = [1, 256], strides = [1, 1]} : vector<1x358xf32> to vector<1x256xf32>
    %398 = vector.broadcast %392 : f32 to vector<1x256xf32>
    %399 = arith.mulf %398, %397 : vector<1x256xf32>
    %400 = arith.addf %396, %399 : vector<1x256xf32>
    %cst_50 = arith.constant 0.000000e+00 : f32
    %401 = vector.broadcast %cst_50 : f32 to vector<1x256xf32>
    %402 = arith.select %329, %400, %401 : vector<1x256xi1>, vector<1x256xf32>
    %403 = arith.addf %320, %402 : vector<1x256xf32>
    %c1_i32_51 = arith.constant 1 : i32
    %404 = vector.broadcast %c1_i32_51 : i32 to vector<1x256xi32>
    %405 = arith.addi %70, %404 : vector<1x256xi32>
    %c0_i32_52 = arith.constant 0 : i32
    %406 = vector.broadcast %c0_i32_52 : i32 to vector<1x256xi32>
    %407 = arith.cmpi sge, %405, %406 : vector<1x256xi32>
    %c1_i32_53 = arith.constant 1 : i32
    %408 = vector.broadcast %c1_i32_53 : i32 to vector<1x256xi32>
    %409 = arith.addi %70, %408 : vector<1x256xi32>
    %c16_i32_54 = arith.constant 16 : i32
    %410 = vector.broadcast %c16_i32_54 : i32 to vector<1x256xi32>
    %411 = arith.cmpi slt, %409, %410 : vector<1x256xi32>
    %412 = arith.andi %407, %411 : vector<1x256xi1>
    %cst_55 = arith.constant 0.000000e+00 : f32
    %413 = vector.broadcast %cst_55 : f32 to vector<1x256xf32>
    %c4 = arith.constant 4 : index
    %414 = memref.load %arg4[%c4] : memref<98xf32, #tpu.memory_space<smem>>
    %c53 = arith.constant 53 : index
    %415 = memref.load %arg4[%c53] : memref<98xf32, #tpu.memory_space<smem>>
    %416 = vector.extract_strided_slice %48 {offsets = [0, 4], sizes = [1, 256], strides = [1, 1]} : vector<1x358xf32> to vector<1x256xf32>
    %417 = vector.broadcast %414 : f32 to vector<1x256xf32>
    %418 = arith.mulf %417, %416 : vector<1x256xf32>
    %419 = arith.addf %413, %418 : vector<1x256xf32>
    %420 = vector.extract_strided_slice %53 {offsets = [0, 4], sizes = [1, 256], strides = [1, 1]} : vector<1x358xf32> to vector<1x256xf32>
    %421 = vector.broadcast %415 : f32 to vector<1x256xf32>
    %422 = arith.mulf %421, %420 : vector<1x256xf32>
    %423 = arith.addf %419, %422 : vector<1x256xf32>
    %c11 = arith.constant 11 : index
    %424 = memref.load %arg4[%c11] : memref<98xf32, #tpu.memory_space<smem>>
    %c60 = arith.constant 60 : index
    %425 = memref.load %arg4[%c60] : memref<98xf32, #tpu.memory_space<smem>>
    %426 = vector.extract_strided_slice %48 {offsets = [0, 20], sizes = [1, 256], strides = [1, 1]} : vector<1x358xf32> to vector<1x256xf32>
    %427 = vector.broadcast %424 : f32 to vector<1x256xf32>
    %428 = arith.mulf %427, %426 : vector<1x256xf32>
    %429 = arith.addf %423, %428 : vector<1x256xf32>
    %430 = vector.extract_strided_slice %53 {offsets = [0, 20], sizes = [1, 256], strides = [1, 1]} : vector<1x358xf32> to vector<1x256xf32>
    %431 = vector.broadcast %425 : f32 to vector<1x256xf32>
    %432 = arith.mulf %431, %430 : vector<1x256xf32>
    %433 = arith.addf %429, %432 : vector<1x256xf32>
    %c18 = arith.constant 18 : index
    %434 = memref.load %arg4[%c18] : memref<98xf32, #tpu.memory_space<smem>>
    %c67 = arith.constant 67 : index
    %435 = memref.load %arg4[%c67] : memref<98xf32, #tpu.memory_space<smem>>
    %436 = vector.extract_strided_slice %48 {offsets = [0, 36], sizes = [1, 256], strides = [1, 1]} : vector<1x358xf32> to vector<1x256xf32>
    %437 = vector.broadcast %434 : f32 to vector<1x256xf32>
    %438 = arith.mulf %437, %436 : vector<1x256xf32>
    %439 = arith.addf %433, %438 : vector<1x256xf32>
    %440 = vector.extract_strided_slice %53 {offsets = [0, 36], sizes = [1, 256], strides = [1, 1]} : vector<1x358xf32> to vector<1x256xf32>
    %441 = vector.broadcast %435 : f32 to vector<1x256xf32>
    %442 = arith.mulf %441, %440 : vector<1x256xf32>
    %443 = arith.addf %439, %442 : vector<1x256xf32>
    %c25 = arith.constant 25 : index
    %444 = memref.load %arg4[%c25] : memref<98xf32, #tpu.memory_space<smem>>
    %c74 = arith.constant 74 : index
    %445 = memref.load %arg4[%c74] : memref<98xf32, #tpu.memory_space<smem>>
    %446 = vector.extract_strided_slice %48 {offsets = [0, 52], sizes = [1, 256], strides = [1, 1]} : vector<1x358xf32> to vector<1x256xf32>
    %447 = vector.broadcast %444 : f32 to vector<1x256xf32>
    %448 = arith.mulf %447, %446 : vector<1x256xf32>
    %449 = arith.addf %443, %448 : vector<1x256xf32>
    %450 = vector.extract_strided_slice %53 {offsets = [0, 52], sizes = [1, 256], strides = [1, 1]} : vector<1x358xf32> to vector<1x256xf32>
    %451 = vector.broadcast %445 : f32 to vector<1x256xf32>
    %452 = arith.mulf %451, %450 : vector<1x256xf32>
    %453 = arith.addf %449, %452 : vector<1x256xf32>
    %c32 = arith.constant 32 : index
    %454 = memref.load %arg4[%c32] : memref<98xf32, #tpu.memory_space<smem>>
    %c81 = arith.constant 81 : index
    %455 = memref.load %arg4[%c81] : memref<98xf32, #tpu.memory_space<smem>>
    %456 = vector.extract_strided_slice %48 {offsets = [0, 68], sizes = [1, 256], strides = [1, 1]} : vector<1x358xf32> to vector<1x256xf32>
    %457 = vector.broadcast %454 : f32 to vector<1x256xf32>
    %458 = arith.mulf %457, %456 : vector<1x256xf32>
    %459 = arith.addf %453, %458 : vector<1x256xf32>
    %460 = vector.extract_strided_slice %53 {offsets = [0, 68], sizes = [1, 256], strides = [1, 1]} : vector<1x358xf32> to vector<1x256xf32>
    %461 = vector.broadcast %455 : f32 to vector<1x256xf32>
    %462 = arith.mulf %461, %460 : vector<1x256xf32>
    %463 = arith.addf %459, %462 : vector<1x256xf32>
    %c39 = arith.constant 39 : index
    %464 = memref.load %arg4[%c39] : memref<98xf32, #tpu.memory_space<smem>>
    %c88 = arith.constant 88 : index
    %465 = memref.load %arg4[%c88] : memref<98xf32, #tpu.memory_space<smem>>
    %466 = vector.extract_strided_slice %48 {offsets = [0, 84], sizes = [1, 256], strides = [1, 1]} : vector<1x358xf32> to vector<1x256xf32>
    %467 = vector.broadcast %464 : f32 to vector<1x256xf32>
    %468 = arith.mulf %467, %466 : vector<1x256xf32>
    %469 = arith.addf %463, %468 : vector<1x256xf32>
    %470 = vector.extract_strided_slice %53 {offsets = [0, 84], sizes = [1, 256], strides = [1, 1]} : vector<1x358xf32> to vector<1x256xf32>
    %471 = vector.broadcast %465 : f32 to vector<1x256xf32>
    %472 = arith.mulf %471, %470 : vector<1x256xf32>
    %473 = arith.addf %469, %472 : vector<1x256xf32>
    %c46 = arith.constant 46 : index
    %474 = memref.load %arg4[%c46] : memref<98xf32, #tpu.memory_space<smem>>
    %c95 = arith.constant 95 : index
    %475 = memref.load %arg4[%c95] : memref<98xf32, #tpu.memory_space<smem>>
    %476 = vector.extract_strided_slice %48 {offsets = [0, 100], sizes = [1, 256], strides = [1, 1]} : vector<1x358xf32> to vector<1x256xf32>
    %477 = vector.broadcast %474 : f32 to vector<1x256xf32>
    %478 = arith.mulf %477, %476 : vector<1x256xf32>
    %479 = arith.addf %473, %478 : vector<1x256xf32>
    %480 = vector.extract_strided_slice %53 {offsets = [0, 100], sizes = [1, 256], strides = [1, 1]} : vector<1x358xf32> to vector<1x256xf32>
    %481 = vector.broadcast %475 : f32 to vector<1x256xf32>
    %482 = arith.mulf %481, %480 : vector<1x256xf32>
    %483 = arith.addf %479, %482 : vector<1x256xf32>
    %cst_56 = arith.constant 0.000000e+00 : f32
    %484 = vector.broadcast %cst_56 : f32 to vector<1x256xf32>
    %485 = arith.select %412, %483, %484 : vector<1x256xi1>, vector<1x256xf32>
    %486 = arith.addf %403, %485 : vector<1x256xf32>
    %c2_i32 = arith.constant 2 : i32
    %487 = vector.broadcast %c2_i32 : i32 to vector<1x256xi32>
    %488 = arith.addi %70, %487 : vector<1x256xi32>
    %c0_i32_57 = arith.constant 0 : i32
    %489 = vector.broadcast %c0_i32_57 : i32 to vector<1x256xi32>
    %490 = arith.cmpi sge, %488, %489 : vector<1x256xi32>
    %c2_i32_58 = arith.constant 2 : i32
    %491 = vector.broadcast %c2_i32_58 : i32 to vector<1x256xi32>
    %492 = arith.addi %70, %491 : vector<1x256xi32>
    %c16_i32_59 = arith.constant 16 : i32
    %493 = vector.broadcast %c16_i32_59 : i32 to vector<1x256xi32>
    %494 = arith.cmpi slt, %492, %493 : vector<1x256xi32>
    %495 = arith.andi %490, %494 : vector<1x256xi1>
    %cst_60 = arith.constant 0.000000e+00 : f32
    %496 = vector.broadcast %cst_60 : f32 to vector<1x256xf32>
    %c5 = arith.constant 5 : index
    %497 = memref.load %arg4[%c5] : memref<98xf32, #tpu.memory_space<smem>>
    %c54 = arith.constant 54 : index
    %498 = memref.load %arg4[%c54] : memref<98xf32, #tpu.memory_space<smem>>
    %499 = vector.extract_strided_slice %48 {offsets = [0, 5], sizes = [1, 256], strides = [1, 1]} : vector<1x358xf32> to vector<1x256xf32>
    %500 = vector.broadcast %497 : f32 to vector<1x256xf32>
    %501 = arith.mulf %500, %499 : vector<1x256xf32>
    %502 = arith.addf %496, %501 : vector<1x256xf32>
    %503 = vector.extract_strided_slice %53 {offsets = [0, 5], sizes = [1, 256], strides = [1, 1]} : vector<1x358xf32> to vector<1x256xf32>
    %504 = vector.broadcast %498 : f32 to vector<1x256xf32>
    %505 = arith.mulf %504, %503 : vector<1x256xf32>
    %506 = arith.addf %502, %505 : vector<1x256xf32>
    %c12 = arith.constant 12 : index
    %507 = memref.load %arg4[%c12] : memref<98xf32, #tpu.memory_space<smem>>
    %c61 = arith.constant 61 : index
    %508 = memref.load %arg4[%c61] : memref<98xf32, #tpu.memory_space<smem>>
    %509 = vector.extract_strided_slice %48 {offsets = [0, 21], sizes = [1, 256], strides = [1, 1]} : vector<1x358xf32> to vector<1x256xf32>
    %510 = vector.broadcast %507 : f32 to vector<1x256xf32>
    %511 = arith.mulf %510, %509 : vector<1x256xf32>
    %512 = arith.addf %506, %511 : vector<1x256xf32>
    %513 = vector.extract_strided_slice %53 {offsets = [0, 21], sizes = [1, 256], strides = [1, 1]} : vector<1x358xf32> to vector<1x256xf32>
    %514 = vector.broadcast %508 : f32 to vector<1x256xf32>
    %515 = arith.mulf %514, %513 : vector<1x256xf32>
    %516 = arith.addf %512, %515 : vector<1x256xf32>
    %c19 = arith.constant 19 : index
    %517 = memref.load %arg4[%c19] : memref<98xf32, #tpu.memory_space<smem>>
    %c68 = arith.constant 68 : index
    %518 = memref.load %arg4[%c68] : memref<98xf32, #tpu.memory_space<smem>>
    %519 = vector.extract_strided_slice %48 {offsets = [0, 37], sizes = [1, 256], strides = [1, 1]} : vector<1x358xf32> to vector<1x256xf32>
    %520 = vector.broadcast %517 : f32 to vector<1x256xf32>
    %521 = arith.mulf %520, %519 : vector<1x256xf32>
    %522 = arith.addf %516, %521 : vector<1x256xf32>
    %523 = vector.extract_strided_slice %53 {offsets = [0, 37], sizes = [1, 256], strides = [1, 1]} : vector<1x358xf32> to vector<1x256xf32>
    %524 = vector.broadcast %518 : f32 to vector<1x256xf32>
    %525 = arith.mulf %524, %523 : vector<1x256xf32>
    %526 = arith.addf %522, %525 : vector<1x256xf32>
    %c26 = arith.constant 26 : index
    %527 = memref.load %arg4[%c26] : memref<98xf32, #tpu.memory_space<smem>>
    %c75 = arith.constant 75 : index
    %528 = memref.load %arg4[%c75] : memref<98xf32, #tpu.memory_space<smem>>
    %529 = vector.extract_strided_slice %48 {offsets = [0, 53], sizes = [1, 256], strides = [1, 1]} : vector<1x358xf32> to vector<1x256xf32>
    %530 = vector.broadcast %527 : f32 to vector<1x256xf32>
    %531 = arith.mulf %530, %529 : vector<1x256xf32>
    %532 = arith.addf %526, %531 : vector<1x256xf32>
    %533 = vector.extract_strided_slice %53 {offsets = [0, 53], sizes = [1, 256], strides = [1, 1]} : vector<1x358xf32> to vector<1x256xf32>
    %534 = vector.broadcast %528 : f32 to vector<1x256xf32>
    %535 = arith.mulf %534, %533 : vector<1x256xf32>
    %536 = arith.addf %532, %535 : vector<1x256xf32>
    %c33 = arith.constant 33 : index
    %537 = memref.load %arg4[%c33] : memref<98xf32, #tpu.memory_space<smem>>
    %c82 = arith.constant 82 : index
    %538 = memref.load %arg4[%c82] : memref<98xf32, #tpu.memory_space<smem>>
    %539 = vector.extract_strided_slice %48 {offsets = [0, 69], sizes = [1, 256], strides = [1, 1]} : vector<1x358xf32> to vector<1x256xf32>
    %540 = vector.broadcast %537 : f32 to vector<1x256xf32>
    %541 = arith.mulf %540, %539 : vector<1x256xf32>
    %542 = arith.addf %536, %541 : vector<1x256xf32>
    %543 = vector.extract_strided_slice %53 {offsets = [0, 69], sizes = [1, 256], strides = [1, 1]} : vector<1x358xf32> to vector<1x256xf32>
    %544 = vector.broadcast %538 : f32 to vector<1x256xf32>
    %545 = arith.mulf %544, %543 : vector<1x256xf32>
    %546 = arith.addf %542, %545 : vector<1x256xf32>
    %c40 = arith.constant 40 : index
    %547 = memref.load %arg4[%c40] : memref<98xf32, #tpu.memory_space<smem>>
    %c89 = arith.constant 89 : index
    %548 = memref.load %arg4[%c89] : memref<98xf32, #tpu.memory_space<smem>>
    %549 = vector.extract_strided_slice %48 {offsets = [0, 85], sizes = [1, 256], strides = [1, 1]} : vector<1x358xf32> to vector<1x256xf32>
    %550 = vector.broadcast %547 : f32 to vector<1x256xf32>
    %551 = arith.mulf %550, %549 : vector<1x256xf32>
    %552 = arith.addf %546, %551 : vector<1x256xf32>
    %553 = vector.extract_strided_slice %53 {offsets = [0, 85], sizes = [1, 256], strides = [1, 1]} : vector<1x358xf32> to vector<1x256xf32>
    %554 = vector.broadcast %548 : f32 to vector<1x256xf32>
    %555 = arith.mulf %554, %553 : vector<1x256xf32>
    %556 = arith.addf %552, %555 : vector<1x256xf32>
    %c47 = arith.constant 47 : index
    %557 = memref.load %arg4[%c47] : memref<98xf32, #tpu.memory_space<smem>>
    %c96 = arith.constant 96 : index
    %558 = memref.load %arg4[%c96] : memref<98xf32, #tpu.memory_space<smem>>
    %559 = vector.extract_strided_slice %48 {offsets = [0, 101], sizes = [1, 256], strides = [1, 1]} : vector<1x358xf32> to vector<1x256xf32>
    %560 = vector.broadcast %557 : f32 to vector<1x256xf32>
    %561 = arith.mulf %560, %559 : vector<1x256xf32>
    %562 = arith.addf %556, %561 : vector<1x256xf32>
    %563 = vector.extract_strided_slice %53 {offsets = [0, 101], sizes = [1, 256], strides = [1, 1]} : vector<1x358xf32> to vector<1x256xf32>
    %564 = vector.broadcast %558 : f32 to vector<1x256xf32>
    %565 = arith.mulf %564, %563 : vector<1x256xf32>
    %566 = arith.addf %562, %565 : vector<1x256xf32>
    %cst_61 = arith.constant 0.000000e+00 : f32
    %567 = vector.broadcast %cst_61 : f32 to vector<1x256xf32>
    %568 = arith.select %495, %566, %567 : vector<1x256xi1>, vector<1x256xf32>
    %569 = arith.addf %486, %568 : vector<1x256xf32>
    %c3_i32 = arith.constant 3 : i32
    %570 = vector.broadcast %c3_i32 : i32 to vector<1x256xi32>
    %571 = arith.addi %70, %570 : vector<1x256xi32>
    %c0_i32_62 = arith.constant 0 : i32
    %572 = vector.broadcast %c0_i32_62 : i32 to vector<1x256xi32>
    %573 = arith.cmpi sge, %571, %572 : vector<1x256xi32>
    %c3_i32_63 = arith.constant 3 : i32
    %574 = vector.broadcast %c3_i32_63 : i32 to vector<1x256xi32>
    %575 = arith.addi %70, %574 : vector<1x256xi32>
    %c16_i32_64 = arith.constant 16 : i32
    %576 = vector.broadcast %c16_i32_64 : i32 to vector<1x256xi32>
    %577 = arith.cmpi slt, %575, %576 : vector<1x256xi32>
    %578 = arith.andi %573, %577 : vector<1x256xi1>
    %cst_65 = arith.constant 0.000000e+00 : f32
    %579 = vector.broadcast %cst_65 : f32 to vector<1x256xf32>
    %c6 = arith.constant 6 : index
    %580 = memref.load %arg4[%c6] : memref<98xf32, #tpu.memory_space<smem>>
    %c55 = arith.constant 55 : index
    %581 = memref.load %arg4[%c55] : memref<98xf32, #tpu.memory_space<smem>>
    %582 = vector.extract_strided_slice %48 {offsets = [0, 6], sizes = [1, 256], strides = [1, 1]} : vector<1x358xf32> to vector<1x256xf32>
    %583 = vector.broadcast %580 : f32 to vector<1x256xf32>
    %584 = arith.mulf %583, %582 : vector<1x256xf32>
    %585 = arith.addf %579, %584 : vector<1x256xf32>
    %586 = vector.extract_strided_slice %53 {offsets = [0, 6], sizes = [1, 256], strides = [1, 1]} : vector<1x358xf32> to vector<1x256xf32>
    %587 = vector.broadcast %581 : f32 to vector<1x256xf32>
    %588 = arith.mulf %587, %586 : vector<1x256xf32>
    %589 = arith.addf %585, %588 : vector<1x256xf32>
    %c13 = arith.constant 13 : index
    %590 = memref.load %arg4[%c13] : memref<98xf32, #tpu.memory_space<smem>>
    %c62 = arith.constant 62 : index
    %591 = memref.load %arg4[%c62] : memref<98xf32, #tpu.memory_space<smem>>
    %592 = vector.extract_strided_slice %48 {offsets = [0, 22], sizes = [1, 256], strides = [1, 1]} : vector<1x358xf32> to vector<1x256xf32>
    %593 = vector.broadcast %590 : f32 to vector<1x256xf32>
    %594 = arith.mulf %593, %592 : vector<1x256xf32>
    %595 = arith.addf %589, %594 : vector<1x256xf32>
    %596 = vector.extract_strided_slice %53 {offsets = [0, 22], sizes = [1, 256], strides = [1, 1]} : vector<1x358xf32> to vector<1x256xf32>
    %597 = vector.broadcast %591 : f32 to vector<1x256xf32>
    %598 = arith.mulf %597, %596 : vector<1x256xf32>
    %599 = arith.addf %595, %598 : vector<1x256xf32>
    %c20 = arith.constant 20 : index
    %600 = memref.load %arg4[%c20] : memref<98xf32, #tpu.memory_space<smem>>
    %c69 = arith.constant 69 : index
    %601 = memref.load %arg4[%c69] : memref<98xf32, #tpu.memory_space<smem>>
    %602 = vector.extract_strided_slice %48 {offsets = [0, 38], sizes = [1, 256], strides = [1, 1]} : vector<1x358xf32> to vector<1x256xf32>
    %603 = vector.broadcast %600 : f32 to vector<1x256xf32>
    %604 = arith.mulf %603, %602 : vector<1x256xf32>
    %605 = arith.addf %599, %604 : vector<1x256xf32>
    %606 = vector.extract_strided_slice %53 {offsets = [0, 38], sizes = [1, 256], strides = [1, 1]} : vector<1x358xf32> to vector<1x256xf32>
    %607 = vector.broadcast %601 : f32 to vector<1x256xf32>
    %608 = arith.mulf %607, %606 : vector<1x256xf32>
    %609 = arith.addf %605, %608 : vector<1x256xf32>
    %c27 = arith.constant 27 : index
    %610 = memref.load %arg4[%c27] : memref<98xf32, #tpu.memory_space<smem>>
    %c76 = arith.constant 76 : index
    %611 = memref.load %arg4[%c76] : memref<98xf32, #tpu.memory_space<smem>>
    %612 = vector.extract_strided_slice %48 {offsets = [0, 54], sizes = [1, 256], strides = [1, 1]} : vector<1x358xf32> to vector<1x256xf32>
    %613 = vector.broadcast %610 : f32 to vector<1x256xf32>
    %614 = arith.mulf %613, %612 : vector<1x256xf32>
    %615 = arith.addf %609, %614 : vector<1x256xf32>
    %616 = vector.extract_strided_slice %53 {offsets = [0, 54], sizes = [1, 256], strides = [1, 1]} : vector<1x358xf32> to vector<1x256xf32>
    %617 = vector.broadcast %611 : f32 to vector<1x256xf32>
    %618 = arith.mulf %617, %616 : vector<1x256xf32>
    %619 = arith.addf %615, %618 : vector<1x256xf32>
    %c34 = arith.constant 34 : index
    %620 = memref.load %arg4[%c34] : memref<98xf32, #tpu.memory_space<smem>>
    %c83 = arith.constant 83 : index
    %621 = memref.load %arg4[%c83] : memref<98xf32, #tpu.memory_space<smem>>
    %622 = vector.extract_strided_slice %48 {offsets = [0, 70], sizes = [1, 256], strides = [1, 1]} : vector<1x358xf32> to vector<1x256xf32>
    %623 = vector.broadcast %620 : f32 to vector<1x256xf32>
    %624 = arith.mulf %623, %622 : vector<1x256xf32>
    %625 = arith.addf %619, %624 : vector<1x256xf32>
    %626 = vector.extract_strided_slice %53 {offsets = [0, 70], sizes = [1, 256], strides = [1, 1]} : vector<1x358xf32> to vector<1x256xf32>
    %627 = vector.broadcast %621 : f32 to vector<1x256xf32>
    %628 = arith.mulf %627, %626 : vector<1x256xf32>
    %629 = arith.addf %625, %628 : vector<1x256xf32>
    %c41 = arith.constant 41 : index
    %630 = memref.load %arg4[%c41] : memref<98xf32, #tpu.memory_space<smem>>
    %c90 = arith.constant 90 : index
    %631 = memref.load %arg4[%c90] : memref<98xf32, #tpu.memory_space<smem>>
    %632 = vector.extract_strided_slice %48 {offsets = [0, 86], sizes = [1, 256], strides = [1, 1]} : vector<1x358xf32> to vector<1x256xf32>
    %633 = vector.broadcast %630 : f32 to vector<1x256xf32>
    %634 = arith.mulf %633, %632 : vector<1x256xf32>
    %635 = arith.addf %629, %634 : vector<1x256xf32>
    %636 = vector.extract_strided_slice %53 {offsets = [0, 86], sizes = [1, 256], strides = [1, 1]} : vector<1x358xf32> to vector<1x256xf32>
    %637 = vector.broadcast %631 : f32 to vector<1x256xf32>
    %638 = arith.mulf %637, %636 : vector<1x256xf32>
    %639 = arith.addf %635, %638 : vector<1x256xf32>
    %c48 = arith.constant 48 : index
    %640 = memref.load %arg4[%c48] : memref<98xf32, #tpu.memory_space<smem>>
    %c97 = arith.constant 97 : index
    %641 = memref.load %arg4[%c97] : memref<98xf32, #tpu.memory_space<smem>>
    %642 = vector.extract_strided_slice %48 {offsets = [0, 102], sizes = [1, 256], strides = [1, 1]} : vector<1x358xf32> to vector<1x256xf32>
    %643 = vector.broadcast %640 : f32 to vector<1x256xf32>
    %644 = arith.mulf %643, %642 : vector<1x256xf32>
    %645 = arith.addf %639, %644 : vector<1x256xf32>
    %646 = vector.extract_strided_slice %53 {offsets = [0, 102], sizes = [1, 256], strides = [1, 1]} : vector<1x358xf32> to vector<1x256xf32>
    %647 = vector.broadcast %641 : f32 to vector<1x256xf32>
    %648 = arith.mulf %647, %646 : vector<1x256xf32>
    %649 = arith.addf %645, %648 : vector<1x256xf32>
    %cst_66 = arith.constant 0.000000e+00 : f32
    %650 = vector.broadcast %cst_66 : f32 to vector<1x256xf32>
    %651 = arith.select %578, %649, %650 : vector<1x256xi1>, vector<1x256xf32>
    %652 = arith.addf %569, %651 : vector<1x256xf32>
    %653 = arith.negf %652 : vector<1x256xf32>
    %654 = math.exp %653 : vector<1x256xf32>
    %cst_67 = arith.constant 1.000000e+00 : f32
    %655 = vector.broadcast %cst_67 : f32 to vector<1x256xf32>
    %656 = arith.addf %655, %654 : vector<1x256xf32>
    %657 = arith.divf %655, %656 : vector<1x256xf32>
    %c0_68 = arith.constant 0 : index
    %c0_69 = arith.constant 0 : index
    %c0_70 = arith.constant 0 : index
    %658 = vector.load %arg1[%c0_68, %c0_69, %c0_70] : memref<1x4x256xf32, #tpu.memory_space<vmem>>, vector<1x4x256xf32>
    %659 = vector.shape_cast %31 : vector<1x4xf32> to vector<1x4x1xf32>
    %660 = vector.broadcast %659 : vector<1x4x1xf32> to vector<1x4x256xf32>
    %661 = arith.mulf %658, %660 : vector<1x4x256xf32>
    %662 = vector.shape_cast %657 : vector<1x256xf32> to vector<1x1x256xf32>
    %663 = vector.broadcast %662 : vector<1x1x256xf32> to vector<1x4x256xf32>
    %664 = arith.mulf %661, %663 : vector<1x4x256xf32>
    %c0_71 = arith.constant 0 : index
    %c0_72 = arith.constant 0 : index
    %c0_73 = arith.constant 0 : index
    %665 = vector.load %arg5[%c0_71, %c0_72, %c0_73] : memref<1x4x256xf32, #tpu.memory_space<vmem>>, vector<1x4x256xf32>
    tpu.vector_store %arg5[%c0_71, %c0_72, %c0_73], %664 {strides = array<i32>} : memref<1x4x256xf32, #tpu.memory_space<vmem>>, vector<1x4x256xf32>,
    return
  }
  func.func @transform_0(%arg0: i32) -> (i32, i32, i32) {
    %c0_i32 = arith.constant 0 : i32
    %c0_i32_0 = arith.constant 0 : i32
    %c0_i32_1 = arith.constant 0 : i32
    return %arg0, %c0_i32, %c0_i32_0 : i32, i32, i32
  }
  func.func @transform_1(%arg0: i32) -> (i32, i32) {
    %c0_i32 = arith.constant 0 : i32
    %c0_i32_0 = arith.constant 0 : i32
    %c0_i32_1 = arith.constant 0 : i32
    return %c0_i32, %c0_i32_0 : i32, i32
  }
  func.func @transform_2(%arg0: i32) -> (i32, i32) {
    %c0_i32 = arith.constant 0 : i32
    %c0_i32_0 = arith.constant 0 : i32
    %c0_i32_1 = arith.constant 0 : i32
    return %c0_i32, %c0_i32_0 : i32, i32
  }
  func.func @transform_3(%arg0: i32) -> i32 {
    %c0_i32 = arith.constant 0 : i32
    %c0_i32_0 = arith.constant 0 : i32
    return %c0_i32 : i32
  }
  func.func @transform_4(%arg0: i32) -> (i32, i32, i32) {
    %c0_i32 = arith.constant 0 : i32
    %c0_i32_0 = arith.constant 0 : i32
    %c0_i32_1 = arith.constant 0 : i32
    return %arg0, %c0_i32, %c0_i32_0 : i32, i32, i32
  }
}

</mosaic_0001>

<llo_original>
// kernel: tpu_custom_call.1
$region0: #{tpu_custom_call.1}
  #allocation0 [shape = 'u32[]', space=smem, size = 0x4, offset = 0x4, fixed_abs, tag = 'smem constant byte address 0x4 - core index']
  #allocation1 [shape = 'u32[144,128]{1,0:T(1,128)}', space=vmem, size = 0x12000, scoped, tag = 'internal scratch']
  %s0 = inlined_call_operand.hbm [shape: f32[2,4,256], index: 0, kind: input, shape index: {}]
  %s1 = inlined_call_operand.hbm [shape: f32[4,4], index: 1, kind: input, shape index: {}]
  %s2 = inlined_call_operand.vmem [shape: f32[1,4], index: 2, kind: input, shape index: {}]
  %s3 = inlined_call_operand.vmem [shape: f32[98], index: 3, kind: input, shape index: {}]
  %s4 = inlined_call_operand.hbm [shape: f32[2,4,256], index: 4, kind: output, shape index: {}]
  %s5 = sld [smem:[#allocation0]]
  $region61: #{tpu_custom_call.1} parent=0
    _
  %s7 = ssub.s32 1, %s5
  %s8 = scalar_select 0, %s7, %s5
  $region1: #{tpu_custom_call.1} parent=0
    #allocation2 [shape = 'u8[8192]{0}', space=vmem, size = 0x2000, scoped, tag = 'input window, operand 0']
    #allocation3 [shape = 's32[2]{0}', space=sflag, size = 0x8, scoped, tag = 'scoped memory for tpu_custom_call.1']
    #allocation4 [shape = 's32[2]{0}', space=sflag, size = 0x8, scoped, tag = 'scoped memory for tpu_custom_call.1']
    #allocation5 [shape = 's32[2]{0}', space=sflag, size = 0x8, scoped, tag = 'scoped memory for tpu_custom_call.1']
    #allocation6 [shape = 'u8[2048]{0}', space=vmem, size = 0x800, scoped, tag = 'input window, operand 1, single buffered']
    #allocation7 [shape = 's32[1]{0}', space=sflag, size = 0x4, scoped, tag = 'scoped memory for tpu_custom_call.1']
    #allocation8 [shape = 'u8[512]{0}', space=smem, size = 0x200, scoped, tag = 'input window, operand 3, single buffered']
    #allocation9 [shape = 'u8[8192]{0}', space=vmem, size = 0x2000, scoped, tag = 'output window, operand 0']
    %9 = vsyncpa [#allocation3], 0
    %s10 = scalar_lea.sflag [#allocation3], 1
    %11 = vsyncpa %s10, 0
    %12 = vsyncpa [#allocation7], 0
    %13 = vsyncpa [#allocation5], 0
    %14 = vsyncpa [#allocation4], 0
    %s15 = scalar_lea.sflag [#allocation4], 1
    %16 = vsyncpa %s15, 0
    loop: start=0, step=1, limit=4
    $region2: #{tpu_custom_call.1} parent=1 // loop_pre_header
      _
    $region3: #{tpu_custom_call.1} parent=1 // loop_header
      %s18 = sphi 0, %s22
      %p19 = scmp.ge.s32.totalorder %s18, 4
      %s28 = sphi 0, %s30
      %s31 = sphi 0, %s28
      %s32 = sphi 0, %s31
      %s48 = sphi 0, %s32
      %s52 = sphi 0, %s52
      %s54 = sphi 0, %s52
      %s55 = sphi 0, %s54
      %s69 = sphi 0, %s55
      %s73 = sphi 0, %s73
      %s75 = sphi 0, %s73
      %s76 = sphi 0, %s75
      %s90 = sphi 0, %s76
      %s94 = sphi 0, %s94
      %s96 = sphi 0, %s94
      %s97 = sphi 0, %s96
      %s111 = sphi 0, %s97
      %s117 = sphi 0, %s119
      %s120 = sphi 0, %s117
      %s121 = sphi 0, %s120
      %s137 = sphi 0, %s121
    $region4: #{tpu_custom_call.1} parent=1 // loop_header_branch
      %21 = sbr.rel (%p19) target = $region8
    $region5: #{tpu_custom_call.1} parent=1 // loop_body
      %s23 = ssub.s32 %s18, 1
      %s24 = ssub.s32 %s18, 2
      %s25 = sadd.s32 %s18, 1
      %s26 = ssub.s32 %s18, %s25
      %p27 = scmp.eq.s32.totalorder %s26, 0
      %s29 = sadd.s32 %s28, 1
      %s30 = scalar_select %p27, %s28, %s29
      %p33 = pneg %p27
      %p34 = scmp.eq.s32.totalorder %s18, 1
      %p35 = por %p33, %p34
      %p36 = scmp.ne.s32.totalorder %s28, %s31
      %p37 = scmp.eq.s32.totalorder %s18, 0
      %p38 = por %p36, %p37
      %p39 = scmp.ne.s32.totalorder %s28, %s31
      %p40 = scmp.eq.s32.totalorder %s23, 1
      %p41 = por %p39, %p40
      %p42 = scmp.ne.s32.totalorder %s31, %s32
      %p43 = scmp.eq.s32.totalorder %s23, 0
      %p44 = por %p42, %p43
      %p45 = scmp.ne.s32.totalorder %s31, %s32
      %p46 = scmp.eq.s32.totalorder %s24, 1
      %p47 = por %p45, %p46
      %p49 = scmp.ne.s32.totalorder %s32, %s48
      %p50 = scmp.eq.s32.totalorder %s24, 0
      %p51 = por %p49, %p50
      %s53 = sadd.s32 %s52, 1
      %p56 = scmp.eq.s32.totalorder %s18, 1
      %p57 = scmp.ne.s32.totalorder %s52, %s54
      %p58 = scmp.eq.s32.totalorder %s18, 0
      %p59 = por %p57, %p58
      %p60 = scmp.ne.s32.totalorder %s52, %s54
      %p61 = scmp.eq.s32.totalorder %s23, 1
      %p62 = por %p60, %p61
      %p63 = scmp.ne.s32.totalorder %s54, %s55
      %p64 = scmp.eq.s32.totalorder %s23, 0
      %p65 = por %p63, %p64
      %p66 = scmp.ne.s32.totalorder %s54, %s55
      %p67 = scmp.eq.s32.totalorder %s24, 1
      %p68 = por %p66, %p67
      %p70 = scmp.ne.s32.totalorder %s55, %s69
      %p71 = scmp.eq.s32.totalorder %s24, 0
      %p72 = por %p70, %p71
      %s74 = sadd.s32 %s73, 1
      %p77 = scmp.eq.s32.totalorder %s18, 1
      %p78 = scmp.ne.s32.totalorder %s73, %s75
      %p79 = scmp.eq.s32.totalorder %s18, 0
      %p80 = por %p78, %p79
      %p81 = scmp.ne.s32.totalorder %s73, %s75
      %p82 = scmp.eq.s32.totalorder %s23, 1
      %p83 = por %p81, %p82
      %p84 = scmp.ne.s32.totalorder %s75, %s76
      %p85 = scmp.eq.s32.totalorder %s23, 0
      %p86 = por %p84, %p85
      %p87 = scmp.ne.s32.totalorder %s75, %s76
      %p88 = scmp.eq.s32.totalorder %s24, 1
      %p89 = por %p87, %p88
      %p91 = scmp.ne.s32.totalorder %s76, %s90
      %p92 = scmp.eq.s32.totalorder %s24, 0
      %p93 = por %p91, %p92
      %s95 = sadd.s32 %s94, 1
      %p98 = scmp.eq.s32.totalorder %s18, 1
      %p99 = scmp.ne.s32.totalorder %s94, %s96
      %p100 = scmp.eq.s32.totalorder %s18, 0
      %p101 = por %p99, %p100
      %p102 = scmp.ne.s32.totalorder %s94, %s96
      %p103 = scmp.eq.s32.totalorder %s23, 1
      %p104 = por %p102, %p103
      %p105 = scmp.ne.s32.totalorder %s96, %s97
      %p106 = scmp.eq.s32.totalorder %s23, 0
      %p107 = por %p105, %p106
      %p108 = scmp.ne.s32.totalorder %s96, %s97
      %p109 = scmp.eq.s32.totalorder %s24, 1
      %p110 = por %p108, %p109
      %p112 = scmp.ne.s32.totalorder %s97, %s111
      %p113 = scmp.eq.s32.totalorder %s24, 0
      %p114 = por %p112, %p113
      %s115 = ssub.s32 %s18, %s25
      %p116 = scmp.eq.s32.totalorder %s115, 0
      %s118 = sadd.s32 %s117, 1
      %s119 = scalar_select %p116, %s117, %s118
      %p122 = pneg %p116
      %p123 = scmp.eq.s32.totalorder %s18, 1
      %p124 = por %p122, %p123
      %p125 = scmp.ne.s32.totalorder %s117, %s120
      %p126 = scmp.eq.s32.totalorder %s18, 0
      %p127 = por %p125, %p126
      %p128 = scmp.ne.s32.totalorder %s117, %s120
      %p129 = scmp.eq.s32.totalorder %s23, 1
      %p130 = por %p128, %p129
      %p131 = scmp.ne.s32.totalorder %s120, %s121
      %p132 = scmp.eq.s32.totalorder %s23, 0
      %p133 = por %p131, %p132
      %p134 = scmp.ne.s32.totalorder %s120, %s121
      %p135 = scmp.eq.s32.totalorder %s24, 1
      %p136 = por %p134, %p135
      %p138 = scmp.ne.s32.totalorder %s121, %s137
      %p139 = scmp.eq.s32.totalorder %s24, 0
      %p140 = por %p138, %p139
      %p141 = scmp.le.s32.totalorder 1, %s18
      %p142 = scmp.lt.s32.totalorder %s18, 3
      %p143 = pnand %p141, %p142
      %p144 = pneg %p143
      // Predicated region
      $region9: #{tpu_custom_call.1} parent=5 // pred_check
        _
      $region10: #{tpu_custom_call.1} parent=5 // pred_check_branch
        %146 = sbr.rel (%p143) target = $region12
      $region11: #{tpu_custom_call.1} parent=5 // pred_region
        %s147 = ssub.s32 %s18, 1
        // Predicated region
        $region13: #{tpu_custom_call.1} parent=11 // pred_check
          %p148 = pneg %p65
        $region14: #{tpu_custom_call.1} parent=11 // pred_check_branch
          %150 = sbr.rel (%p148) target = $region16
        $region15: #{tpu_custom_call.1} parent=11 // pred_region
          %s152 = ssub.s32 64, 64
          %153 = vsyncadd [#allocation7], %s152
          %s155 = sshll.u32 [#allocation6], 4
          %s156 = int_to_ptr.vmem [resolvable:$true] %s155
          %158 = dma.hbm_to_vmem [thread:$0]  %s1, 64, %s156, [#allocation7]
        $region16: #{tpu_custom_call.1} parent=11 // pred_fallthru
          _
        // Predicated region
        $region17: #{tpu_custom_call.1} parent=11 // pred_check
          %p159 = pneg %p86
        $region18: #{tpu_custom_call.1} parent=11 // pred_check_branch
          %161 = sbr.rel (%p159) target = $region20
        $region19: #{tpu_custom_call.1} parent=11 // pred_region
          _
        $region20: #{tpu_custom_call.1} parent=11 // pred_fallthru
          _
        // Predicated region
        $region21: #{tpu_custom_call.1} parent=11 // pred_check
          %p162 = pneg %p107
        $region22: #{tpu_custom_call.1} parent=11 // pred_check_branch
          %164 = sbr.rel (%p162) target = $region24
        $region23: #{tpu_custom_call.1} parent=11 // pred_region
          %s166 = ssub.s32 16, 16
          %167 = vsyncadd [#allocation5], %s166
          %s169 = sshll.u32 %s3, 4
          %s170 = int_to_ptr.vmem [resolvable:$true] %s169
          %172 = dma.vmem_to_smem %s170, 16, [#allocation8], [#allocation5]
        $region24: #{tpu_custom_call.1} parent=11 // pred_fallthru
          _
      $region12: #{tpu_custom_call.1} parent=5 // pred_fallthru
        _
      %p173 = scmp.lt.s32.totalorder %s18, 2
      // Predicated region
      $region25: #{tpu_custom_call.1} parent=5 // pred_check
        %p174 = pneg %p173
      $region26: #{tpu_custom_call.1} parent=5 // pred_check_branch
        %176 = sbr.rel (%p174) target = $region28
      $region27: #{tpu_custom_call.1} parent=5 // pred_region
        // Predicated region
        $region29: #{tpu_custom_call.1} parent=27 // pred_check
          %p177 = pneg %p38
        $region30: #{tpu_custom_call.1} parent=27 // pred_check_branch
          %179 = sbr.rel (%p177) target = $region32
        $region31: #{tpu_custom_call.1} parent=27 // pred_region
          %s180 = sand.u32 %s28, 1
          %s181 = scalar_lea.sflag [#allocation3], %s180
          %s182 = sand.u32 %s28, 1
          %s183 = smul.addr %s182, 8
          %s184 = scalar_lea.vmem [#allocation2], %s183
          %s186 = ssub.s32 128, 128
          %187 = vsyncadd %s181, %s186
          %s188 = smul.addr %s18, 2
          %s189 = smul.addr %s188, 64
          %s190 = scalar_lea.hbm %s0, %s189
          %s192 = sshll.u32 %s184, 4
          %s193 = int_to_ptr.vmem [resolvable:$true] %s192
          %195 = dma.hbm_to_vmem [thread:$0]  %s190, 128, %s193, %s181
        $region32: #{tpu_custom_call.1} parent=27 // pred_fallthru
          _
      $region28: #{tpu_custom_call.1} parent=5 // pred_fallthru
        _
      %p196 = scmp.le.s32.totalorder 1, %s18
      %p197 = scmp.lt.s32.totalorder %s18, 3
      %p198 = pnand %p196, %p197
      %p199 = pneg %p198
      // Predicated region
      $region33: #{tpu_custom_call.1} parent=5 // pred_check
        _
      $region34: #{tpu_custom_call.1} parent=5 // pred_check_branch
        %201 = sbr.rel (%p198) target = $region36
      $region35: #{tpu_custom_call.1} parent=5 // pred_region
        %s202 = ssub.s32 %s18, 1
        %s203 = sand.u32 %s31, 1
        %s204 = scalar_lea.sflag [#allocation3], %s203
        %s205 = sand.u32 %s31, 1
        %s206 = smul.addr %s205, 8
        %s207 = scalar_lea.vmem [#allocation2], %s206
        // Predicated region
        $region37: #{tpu_custom_call.1} parent=35 // pred_check
          %p208 = pneg %p44
        $region38: #{tpu_custom_call.1} parent=35 // pred_check_branch
          %210 = sbr.rel (%p208) target = $region40
        $region39: #{tpu_custom_call.1} parent=35 // pred_region
          %211 = dma.done %s204, 128
        $region40: #{tpu_custom_call.1} parent=35 // pred_fallthru
          _
        // Predicated region
        $region41: #{tpu_custom_call.1} parent=35 // pred_check
          %p212 = pneg %p65
        $region42: #{tpu_custom_call.1} parent=35 // pred_check_branch
          %214 = sbr.rel (%p212) target = $region44
        $region43: #{tpu_custom_call.1} parent=35 // pred_region
          %215 = dma.done [#allocation7], 64
        $region44: #{tpu_custom_call.1} parent=35 // pred_fallthru
          _
        // Predicated region
        $region45: #{tpu_custom_call.1} parent=35 // pred_check
          %p216 = pneg %p107
        $region46: #{tpu_custom_call.1} parent=35 // pred_check_branch
          %218 = sbr.rel (%p216) target = $region48
        $region47: #{tpu_custom_call.1} parent=35 // pred_region
          %219 = dma.done [#allocation5], 16
        $region48: #{tpu_custom_call.1} parent=35 // pred_fallthru
          _
        %220 = sfence
        %s221 = sand.u32 %s31, 1
        %s222 = scalar_lea.sflag [#allocation3], %s221
        %s223 = sand.u32 %s31, 1
        %s224 = smul.addr %s223, 8
        %s225 = scalar_lea.vmem [#allocation2], %s224
        %p226 = pneg %p44
        %p227 = pneg %p41
        %p228 = pneg %p65
        %p229 = pneg %p62
        %p230 = pneg %p86
        %p231 = pneg %p83
        %p232 = pneg %p107
        %p233 = pneg %p104
        %p234 = pneg %p133
        %p235 = pneg %p130
        %s236 = sand.u32 %s120, 1
        %s237 = scalar_lea.sflag [#allocation4], %s236
        %s238 = sand.u32 %s120, 1
        %s239 = smul.addr %s238, 8
        %s240 = scalar_lea.vmem [#allocation9], %s239
        %v241 = vld [vmem:[%s207] sm:$0xff]
        %v243 = vcombine.high %v241, %v241
        %vm245 = vcmask 1043456
        %v246 = vsel %vm245, %v241, 0.0
        %v247 = vsel %vm245, %v243, 0.0
        %v248 = vadd.f32 %v246, %v247
        %249 = vadd.xlane.f32.xlu0 %v248
        %v250 = vpop.xlane.xlu0 %249
        %v251 = vmul.f32 %v250, 0.00390625
        %v252 = vld [vmem:[#allocation6] sm:$0x1]
        %v253 = vmul.f32 %v251, %v252
        %v254 = vadd.f32 %v253, 0.0
        %v255 = vld [vmem:[#allocation6 + $0x1] sm:$0x1]
        %v257 = vrot.slane %v255, 7
        %v259 = vmul.f32 %v251, %v257
        %v261 = vrot.slane %v259, 1
        %v263 = vadd.f32 %v254, %v261
        %v264 = vld [vmem:[#allocation6 + $0x2] sm:$0x1]
        %v266 = vrot.slane %v264, 6
        %v268 = vmul.f32 %v251, %v266
        %v270 = vrot.slane %v268, 2
        %v272 = vadd.f32 %v263, %v270
        %v273 = vld [vmem:[#allocation6 + $0x3] sm:$0x1]
        %v275 = vrot.slane %v273, 5
        %v277 = vmul.f32 %v251, %v275
        %v279 = vrot.slane %v277, 3
        %v281 = vadd.f32 %v272, %v279
        %v282 = vld [vmem:[%s2] sm:$0x1]
        %v283 = vadd.f32 %v281, %v282
        %v284 = vxor.u32 %v283, 2147483648
        %v285 = vmul.f32 %v284, 1.442695
        %v286 = vpow.pop %v285
        %v287 = vadd.f32 %v286, 1.0
        %v288 = vrcp.pop %v287
        %v289 = vmul.f32 1.0, %v288
        %v290 = vlaneseq
        %v291 = vshrl.u32 %v290, 7
        %v292 = vsub.s32 0, %v291
        %v293 = vrot.slane %v289, %v292
        %295 = vbcast.lane.b32.xlu0 %v293, 256
        %v296 = vpop.permute.xlu0 %295
        %v299 = vunpack.c.l.s4 839922192
        %v300 = vunpack.c.0.s8 %v299
        %v301 = vlaneseq
        %v302 = vshrl.u32 %v301, 7
        %v303 = vsub.s32 %v300, %v302
        %v304 = vrot.slane %v296, %v303
        %v306 = vmul.f32 %v241, %v304
        %v308 = vcombine.high %v306, %v306
        %v310 = vsel %vm245, %v306, 0.0
        %v311 = vrot.slane %v310, 4
        %v312 = vadd.f32 %v310, %v311
        %v313 = vrot.slane %v312, 2
        %v314 = vadd.f32 %v312, %v313
        %v315 = vrot.slane %v314, 1
        %v316 = vadd.f32 %v314, %v315
        %v317 = vsel %vm245, %v308, 0.0
        %v318 = vrot.slane %v317, 4
        %v319 = vadd.f32 %v317, %v318
        %v320 = vrot.slane %v319, 2
        %v321 = vadd.f32 %v319, %v320
        %v322 = vrot.slane %v321, 1
        %v323 = vadd.f32 %v321, %v322
        %v324 = vadd.f32 %v316, 0.0
        %v325 = vadd.f32 %v323, 0.0
        %v326 = vsel %vm245, %v306, -inf
        %v327 = vrot.slane %v326, 4
        %v328 = vmax.f32 %v326, %v327
        %v329 = vrot.slane %v328, 2
        %v330 = vmax.f32 %v328, %v329
        %v331 = vrot.slane %v330, 1
        %v332 = vmax.f32 %v330, %v331
        %v333 = vsel %vm245, %v308, -inf
        %v334 = vrot.slane %v333, 4
        %v335 = vmax.f32 %v333, %v334
        %v336 = vrot.slane %v335, 2
        %v337 = vmax.f32 %v335, %v336
        %v338 = vrot.slane %v337, 1
        %v339 = vmax.f32 %v337, %v338
        %v340 = vmul.f32 %v324, 0.25
        %v341 = vmul.f32 %v325, 0.25
        %344 = vrot.lane.b32.xlu0 %v340, 51
        %v345 = vpop.permute.xlu0 %344
        %346 = vrot.lane.b32.xlu0 %v341, 51
        %v347 = vpop.permute.xlu0 %346
        %vm348 = vcmask 416768
        %v349 = vsel %vm348, %v345, %v347
        %v353 = vsel %vm348, 0.0, %v345
        %v354 = vsel %vm348, %v347, 0.0
        %357 = vrot.lane.b32.xlu0 %v332, 51
        %v358 = vpop.permute.xlu0 %357
        %359 = vrot.lane.b32.xlu0 %v339, 51
        %v360 = vpop.permute.xlu0 %359
        %v361 = vsel %vm348, %v358, %v360
        %v365 = vsel %vm348, 0.0, %v358
        %v366 = vsel %vm348, %v360, 0.0
        %v367 = vlaneseq
        %v368 = vand.u32 %v367, 127
        %v369 = vadd.s32 %v368, 128
        %vm370 = vcmp.lt.s32.totalorder %v368, 0
        %v371 = vsub.s32 0, %v368
        %v372 = vsel %vm370, %v371, %v368
        %v373 = vshrl.u32 %v372, 4
        %v374 = vand.u32 %v372, 15
        %v375 = vsub.s32 0, %v374
        %v376 = vsel %vm370, %v375, %v374
        %vm377 = vcmp.lt.s32.totalorder %v369, 0
        %v378 = vsub.s32 0, %v369
        %v379 = vsel %vm377, %v378, %v369
        %v380 = vshrl.u32 %v379, 4
        %v381 = vand.u32 %v379, 15
        %v382 = vsub.s32 0, %v381
        %v383 = vsel %vm377, %v382, %v381
        %vm384 = vcmp.ne.s32.totalorder %v376, 0
        %vm385 = vcmp.ne.s32.totalorder %v383, 0
        %vm386 = vcmp.lt.s32.totalorder %v376, 0
        %vm387 = vcmp.lt.s32.totalorder %v383, 0
        %vm388 = vmand %vm386, %vm384
        %vm389 = vmand %vm387, %vm385
        %v390 = vadd.s32 %v376, 16
        %v391 = vadd.s32 %v383, 16
        %v392 = vsel %vm388, %v390, %v376
        %v393 = vsel %vm389, %v391, %v383
        %v394 = vadd.s32 %v392, 4294967293
        %v395 = vadd.s32 %v393, 4294967293
        %vm396 = vcmp.ge.s32.totalorder %v394, 0
        %vm397 = vcmp.ge.s32.totalorder %v395, 0
        %vm398 = vcmp.lt.s32.totalorder %v394, 16
        %vm399 = vcmp.lt.s32.totalorder %v395, 16
        %vm400 = vmand %vm396, %vm398
        %vm401 = vmand %vm397, %vm399
        %s402 = sld [smem:[#allocation8]]
        %s403 = sld [smem:[#allocation8 + $0x31]]
        %v404 = vstv %s402
        %v405 = vmul.f32 %v404, %v353
        %v406 = vmul.f32 %v404, %v349
        %v407 = vadd.f32 %v405, 0.0
        %v408 = vadd.f32 %v406, 0.0
        %v409 = vstv %s403
        %v410 = vmul.f32 %v409, %v365
        %v411 = vmul.f32 %v409, %v361
        %v412 = vadd.f32 %v407, %v410
        %v413 = vadd.f32 %v408, %v411
        %s414 = sld [smem:[#allocation8 + $0x7]]
        %s415 = sld [smem:[#allocation8 + $0x38]]
        %v416 = vstv %s414
        %v417 = vmul.f32 %v416, %v353
        %v418 = vmul.f32 %v416, %v349
        %v419 = vmul.f32 %v416, %v354
        %423 = vrot.lane.b32.xlu0 %v417, 112
        %v424 = vpop.permute.xlu0 %423
        %425 = vrot.lane.b32.xlu0 %v418, 112
        %v426 = vpop.permute.xlu0 %425
        %427 = vrot.lane.b32.xlu0 %v419, 112
        %v428 = vpop.permute.xlu0 %427
        %vm429 = vcmask 916480
        %v430 = vsel %vm429, %v424, %v426
        %v431 = vsel %vm429, %v426, %v428
        %v434 = vadd.f32 %v412, %v430
        %v435 = vadd.f32 %v413, %v431
        %v436 = vstv %s415
        %v437 = vmul.f32 %v436, %v365
        %v438 = vmul.f32 %v436, %v361
        %v439 = vmul.f32 %v436, %v366
        %443 = vrot.lane.b32.xlu0 %v437, 112
        %v444 = vpop.permute.xlu0 %443
        %445 = vrot.lane.b32.xlu0 %v438, 112
        %v446 = vpop.permute.xlu0 %445
        %447 = vrot.lane.b32.xlu0 %v439, 112
        %v448 = vpop.permute.xlu0 %447
        %v449 = vsel %vm429, %v444, %v446
        %v450 = vsel %vm429, %v446, %v448
        %v453 = vadd.f32 %v434, %v449
        %v454 = vadd.f32 %v435, %v450
        %s455 = sld [smem:[#allocation8 + $0xe]]
        %s456 = sld [smem:[#allocation8 + $0x3f]]
        %v457 = vstv %s455
        %v458 = vmul.f32 %v457, %v353
        %v459 = vmul.f32 %v457, %v349
        %v460 = vmul.f32 %v457, %v354
        %464 = vrot.lane.b32.xlu0 %v458, 96
        %v465 = vpop.permute.xlu0 %464
        %466 = vrot.lane.b32.xlu0 %v459, 96
        %v467 = vpop.permute.xlu0 %466
        %468 = vrot.lane.b32.xlu0 %v460, 96
        %v469 = vpop.permute.xlu0 %468
        %vm470 = vcmask 785408
        %v471 = vsel %vm470, %v465, %v467
        %v472 = vsel %vm470, %v467, %v469
        %v475 = vadd.f32 %v453, %v471
        %v476 = vadd.f32 %v454, %v472
        %v477 = vstv %s456
        %v478 = vmul.f32 %v477, %v365
        %v479 = vmul.f32 %v477, %v361
        %v480 = vmul.f32 %v477, %v366
        %484 = vrot.lane.b32.xlu0 %v478, 96
        %v485 = vpop.permute.xlu0 %484
        %486 = vrot.lane.b32.xlu0 %v479, 96
        %v487 = vpop.permute.xlu0 %486
        %488 = vrot.lane.b32.xlu0 %v480, 96
        %v489 = vpop.permute.xlu0 %488
        %v490 = vsel %vm470, %v485, %v487
        %v491 = vsel %vm470, %v487, %v489
        %v494 = vadd.f32 %v475, %v490
        %v495 = vadd.f32 %v476, %v491
        %s496 = sld [smem:[#allocation8 + $0x15]]
        %s497 = sld [smem:[#allocation8 + $0x46]]
        %v498 = vstv %s496
        %v499 = vmul.f32 %v498, %v353
        %v500 = vmul.f32 %v498, %v349
        %v501 = vmul.f32 %v498, %v354
        %505 = vrot.lane.b32.xlu0 %v499, 80
        %v506 = vpop.permute.xlu0 %505
        %507 = vrot.lane.b32.xlu0 %v500, 80
        %v508 = vpop.permute.xlu0 %507
        %509 = vrot.lane.b32.xlu0 %v501, 80
        %v510 = vpop.permute.xlu0 %509
        %vm511 = vcmask 654336
        %v512 = vsel %vm511, %v506, %v508
        %v513 = vsel %vm511, %v508, %v510
        %v516 = vadd.f32 %v494, %v512
        %v517 = vadd.f32 %v495, %v513
        %v518 = vstv %s497
        %v519 = vmul.f32 %v518, %v365
        %v520 = vmul.f32 %v518, %v361
        %v521 = vmul.f32 %v518, %v366
        %525 = vrot.lane.b32.xlu0 %v519, 80
        %v526 = vpop.permute.xlu0 %525
        %527 = vrot.lane.b32.xlu0 %v520, 80
        %v528 = vpop.permute.xlu0 %527
        %529 = vrot.lane.b32.xlu0 %v521, 80
        %v530 = vpop.permute.xlu0 %529
        %v531 = vsel %vm511, %v526, %v528
        %v532 = vsel %vm511, %v528, %v530
        %v535 = vadd.f32 %v516, %v531
        %v536 = vadd.f32 %v517, %v532
        %s537 = sld [smem:[#allocation8 + $0x1c]]
        %s538 = sld [smem:[#allocation8 + $0x4d]]
        %v539 = vstv %s537
        %v540 = vmul.f32 %v539, %v353
        %v541 = vmul.f32 %v539, %v349
        %v542 = vmul.f32 %v539, %v354
        %546 = vrot.lane.b32.xlu0 %v540, 64
        %v547 = vpop.permute.xlu0 %546
        %548 = vrot.lane.b32.xlu0 %v541, 64
        %v549 = vpop.permute.xlu0 %548
        %550 = vrot.lane.b32.xlu0 %v542, 64
        %v551 = vpop.permute.xlu0 %550
        %vm552 = vcmask 523264
        %v553 = vsel %vm552, %v547, %v549
        %v554 = vsel %vm552, %v549, %v551
        %v557 = vadd.f32 %v535, %v553
        %v558 = vadd.f32 %v536, %v554
        %v559 = vstv %s538
        %v560 = vmul.f32 %v559, %v365
        %v561 = vmul.f32 %v559, %v361
        %v562 = vmul.f32 %v559, %v366
        %566 = vrot.lane.b32.xlu0 %v560, 64
        %v567 = vpop.permute.xlu0 %566
        %568 = vrot.lane.b32.xlu0 %v561, 64
        %v569 = vpop.permute.xlu0 %568
        %570 = vrot.lane.b32.xlu0 %v562, 64
        %v571 = vpop.permute.xlu0 %570
        %v572 = vsel %vm552, %v567, %v569
        %v573 = vsel %vm552, %v569, %v571
        %v576 = vadd.f32 %v557, %v572
        %v577 = vadd.f32 %v558, %v573
        %s578 = sld [smem:[#allocation8 + $0x23]]
        %s579 = sld [smem:[#allocation8 + $0x54]]
        %v580 = vstv %s578
        %v581 = vmul.f32 %v580, %v353
        %v582 = vmul.f32 %v580, %v349
        %v583 = vmul.f32 %v580, %v354
        %587 = vrot.lane.b32.xlu0 %v581, 48
        %v588 = vpop.permute.xlu0 %587
        %589 = vrot.lane.b32.xlu0 %v582, 48
        %v590 = vpop.permute.xlu0 %589
        %591 = vrot.lane.b32.xlu0 %v583, 48
        %v592 = vpop.permute.xlu0 %591
        %vm593 = vcmask 392192
        %v594 = vsel %vm593, %v588, %v590
        %v595 = vsel %vm593, %v590, %v592
        %v598 = vadd.f32 %v576, %v594
        %v599 = vadd.f32 %v577, %v595
        %v600 = vstv %s579
        %v601 = vmul.f32 %v600, %v365
        %v602 = vmul.f32 %v600, %v361
        %v603 = vmul.f32 %v600, %v366
        %607 = vrot.lane.b32.xlu0 %v601, 48
        %v608 = vpop.permute.xlu0 %607
        %609 = vrot.lane.b32.xlu0 %v602, 48
        %v610 = vpop.permute.xlu0 %609
        %611 = vrot.lane.b32.xlu0 %v603, 48
        %v612 = vpop.permute.xlu0 %611
        %v613 = vsel %vm593, %v608, %v610
        %v614 = vsel %vm593, %v610, %v612
        %v617 = vadd.f32 %v598, %v613
        %v618 = vadd.f32 %v599, %v614
        %s619 = sld [smem:[#allocation8 + $0x2a]]
        %s620 = sld [smem:[#allocation8 + $0x5b]]
        %v621 = vstv %s619
        %v622 = vmul.f32 %v621, %v353
        %v623 = vmul.f32 %v621, %v349
        %v624 = vmul.f32 %v621, %v354
        %628 = vrot.lane.b32.xlu0 %v622, 32
        %v629 = vpop.permute.xlu0 %628
        %630 = vrot.lane.b32.xlu0 %v623, 32
        %v631 = vpop.permute.xlu0 %630
        %632 = vrot.lane.b32.xlu0 %v624, 32
        %v633 = vpop.permute.xlu0 %632
        %vm634 = vcmask 261120
        %v635 = vsel %vm634, %v629, %v631
        %v636 = vsel %vm634, %v631, %v633
        %v639 = vadd.f32 %v617, %v635
        %v640 = vadd.f32 %v618, %v636
        %v641 = vstv %s620
        %v642 = vmul.f32 %v641, %v365
        %v643 = vmul.f32 %v641, %v361
        %v644 = vmul.f32 %v641, %v366
        %648 = vrot.lane.b32.xlu0 %v642, 32
        %v649 = vpop.permute.xlu0 %648
        %650 = vrot.lane.b32.xlu0 %v643, 32
        %v651 = vpop.permute.xlu0 %650
        %652 = vrot.lane.b32.xlu0 %v644, 32
        %v653 = vpop.permute.xlu0 %652
        %v654 = vsel %vm634, %v649, %v651
        %v655 = vsel %vm634, %v651, %v653
        %v658 = vadd.f32 %v639, %v654
        %v659 = vadd.f32 %v640, %v655
        %v660 = vsel %vm400, %v658, 0.0
        %v661 = vsel %vm401, %v659, 0.0
        %v662 = vadd.f32 %v660, 0.0
        %v663 = vadd.f32 %v661, 0.0
        %v664 = vadd.s32 %v392, 4294967294
        %v665 = vadd.s32 %v393, 4294967294
        %vm666 = vcmp.ge.s32.totalorder %v664, 0
        %vm667 = vcmp.ge.s32.totalorder %v665, 0
        %vm668 = vcmp.lt.s32.totalorder %v664, 16
        %vm669 = vcmp.lt.s32.totalorder %v665, 16
        %vm670 = vmand %vm666, %vm668
        %vm671 = vmand %vm667, %vm669
        %s672 = sld [smem:[#allocation8 + $0x1]]
        %s673 = sld [smem:[#allocation8 + $0x32]]
        %v674 = vstv %s672
        %v675 = vmul.f32 %v674, %v353
        %v676 = vmul.f32 %v674, %v349
        %v677 = vmul.f32 %v674, %v354
        %v678 = vadd.f32 %v675, 0.0
        %v679 = vadd.f32 %v676, 0.0
        %v680 = vadd.f32 %v677, 0.0
        %v681 = vstv %s673
        %v682 = vmul.f32 %v681, %v365
        %v683 = vmul.f32 %v681, %v361
        %v684 = vmul.f32 %v681, %v366
        %v685 = vadd.f32 %v678, %v682
        %v686 = vadd.f32 %v679, %v683
        %v687 = vadd.f32 %v680, %v684
        %s688 = sld [smem:[#allocation8 + $0x8]]
        %s689 = sld [smem:[#allocation8 + $0x39]]
        %v690 = vstv %s688
        %v691 = vmul.f32 %v690, %v353
        %v692 = vmul.f32 %v690, %v349
        %v693 = vmul.f32 %v690, %v354
        %697 = vrot.lane.b32.xlu0 %v691, 112
        %v698 = vpop.permute.xlu0 %697
        %699 = vrot.lane.b32.xlu0 %v692, 112
        %v700 = vpop.permute.xlu0 %699
        %701 = vrot.lane.b32.xlu0 %v693, 112
        %v702 = vpop.permute.xlu0 %701
        %v703 = vsel %vm429, %v698, %v700
        %v704 = vsel %vm429, %v700, %v702
        %v708 = vadd.f32 %v685, %v703
        %v709 = vadd.f32 %v686, %v704
        %v710 = vadd.f32 %v687, %v702
        %v711 = vstv %s689
        %v712 = vmul.f32 %v711, %v365
        %v713 = vmul.f32 %v711, %v361
        %v714 = vmul.f32 %v711, %v366
        %718 = vrot.lane.b32.xlu0 %v712, 112
        %v719 = vpop.permute.xlu0 %718
        %720 = vrot.lane.b32.xlu0 %v713, 112
        %v721 = vpop.permute.xlu0 %720
        %722 = vrot.lane.b32.xlu0 %v714, 112
        %v723 = vpop.permute.xlu0 %722
        %v724 = vsel %vm429, %v719, %v721
        %v725 = vsel %vm429, %v721, %v723
        %v729 = vadd.f32 %v708, %v724
        %v730 = vadd.f32 %v709, %v725
        %v731 = vadd.f32 %v710, %v723
        %s732 = sld [smem:[#allocation8 + $0xf]]
        %s733 = sld [smem:[#allocation8 + $0x40]]
        %v734 = vstv %s732
        %v735 = vmul.f32 %v734, %v353
        %v736 = vmul.f32 %v734, %v349
        %v737 = vmul.f32 %v734, %v354
        %741 = vrot.lane.b32.xlu0 %v735, 96
        %v742 = vpop.permute.xlu0 %741
        %743 = vrot.lane.b32.xlu0 %v736, 96
        %v744 = vpop.permute.xlu0 %743
        %745 = vrot.lane.b32.xlu0 %v737, 96
        %v746 = vpop.permute.xlu0 %745
        %v747 = vsel %vm470, %v742, %v744
        %v748 = vsel %vm470, %v744, %v746
        %v752 = vadd.f32 %v729, %v747
        %v753 = vadd.f32 %v730, %v748
        %v754 = vadd.f32 %v731, %v746
        %v755 = vstv %s733
        %v756 = vmul.f32 %v755, %v365
        %v757 = vmul.f32 %v755, %v361
        %v758 = vmul.f32 %v755, %v366
        %762 = vrot.lane.b32.xlu0 %v756, 96
        %v763 = vpop.permute.xlu0 %762
        %764 = vrot.lane.b32.xlu0 %v757, 96
        %v765 = vpop.permute.xlu0 %764
        %766 = vrot.lane.b32.xlu0 %v758, 96
        %v767 = vpop.permute.xlu0 %766
        %v768 = vsel %vm470, %v763, %v765
        %v769 = vsel %vm470, %v765, %v767
        %v773 = vadd.f32 %v752, %v768
        %v774 = vadd.f32 %v753, %v769
        %v775 = vadd.f32 %v754, %v767
        %s776 = sld [smem:[#allocation8 + $0x16]]
        %s777 = sld [smem:[#allocation8 + $0x47]]
        %v778 = vstv %s776
        %v779 = vmul.f32 %v778, %v353
        %v780 = vmul.f32 %v778, %v349
        %v781 = vmul.f32 %v778, %v354
        %785 = vrot.lane.b32.xlu0 %v779, 80
        %v786 = vpop.permute.xlu0 %785
        %787 = vrot.lane.b32.xlu0 %v780, 80
        %v788 = vpop.permute.xlu0 %787
        %789 = vrot.lane.b32.xlu0 %v781, 80
        %v790 = vpop.permute.xlu0 %789
        %v791 = vsel %vm511, %v786, %v788
        %v792 = vsel %vm511, %v788, %v790
        %v796 = vadd.f32 %v773, %v791
        %v797 = vadd.f32 %v774, %v792
        %v798 = vadd.f32 %v775, %v790
        %v799 = vstv %s777
        %v800 = vmul.f32 %v799, %v365
        %v801 = vmul.f32 %v799, %v361
        %v802 = vmul.f32 %v799, %v366
        %806 = vrot.lane.b32.xlu0 %v800, 80
        %v807 = vpop.permute.xlu0 %806
        %808 = vrot.lane.b32.xlu0 %v801, 80
        %v809 = vpop.permute.xlu0 %808
        %810 = vrot.lane.b32.xlu0 %v802, 80
        %v811 = vpop.permute.xlu0 %810
        %v812 = vsel %vm511, %v807, %v809
        %v813 = vsel %vm511, %v809, %v811
        %v817 = vadd.f32 %v796, %v812
        %v818 = vadd.f32 %v797, %v813
        %v819 = vadd.f32 %v798, %v811
        %s820 = sld [smem:[#allocation8 + $0x1d]]
        %s821 = sld [smem:[#allocation8 + $0x4e]]
        %v822 = vstv %s820
        %v823 = vmul.f32 %v822, %v353
        %v824 = vmul.f32 %v822, %v349
        %v825 = vmul.f32 %v822, %v354
        %829 = vrot.lane.b32.xlu0 %v823, 64
        %v830 = vpop.permute.xlu0 %829
        %831 = vrot.lane.b32.xlu0 %v824, 64
        %v832 = vpop.permute.xlu0 %831
        %833 = vrot.lane.b32.xlu0 %v825, 64
        %v834 = vpop.permute.xlu0 %833
        %v835 = vsel %vm552, %v830, %v832
        %v836 = vsel %vm552, %v832, %v834
        %v840 = vadd.f32 %v817, %v835
        %v841 = vadd.f32 %v818, %v836
        %v842 = vadd.f32 %v819, %v834
        %v843 = vstv %s821
        %v844 = vmul.f32 %v843, %v365
        %v845 = vmul.f32 %v843, %v361
        %v846 = vmul.f32 %v843, %v366
        %850 = vrot.lane.b32.xlu0 %v844, 64
        %v851 = vpop.permute.xlu0 %850
        %852 = vrot.lane.b32.xlu0 %v845, 64
        %v853 = vpop.permute.xlu0 %852
        %854 = vrot.lane.b32.xlu0 %v846, 64
        %v855 = vpop.permute.xlu0 %854
        %v856 = vsel %vm552, %v851, %v853
        %v857 = vsel %vm552, %v853, %v855
        %v861 = vadd.f32 %v840, %v856
        %v862 = vadd.f32 %v841, %v857
        %v863 = vadd.f32 %v842, %v855
        %s864 = sld [smem:[#allocation8 + $0x24]]
        %s865 = sld [smem:[#allocation8 + $0x55]]
        %v866 = vstv %s864
        %v867 = vmul.f32 %v866, %v353
        %v868 = vmul.f32 %v866, %v349
        %v869 = vmul.f32 %v866, %v354
        %873 = vrot.lane.b32.xlu0 %v867, 48
        %v874 = vpop.permute.xlu0 %873
        %875 = vrot.lane.b32.xlu0 %v868, 48
        %v876 = vpop.permute.xlu0 %875
        %877 = vrot.lane.b32.xlu0 %v869, 48
        %v878 = vpop.permute.xlu0 %877
        %v879 = vsel %vm593, %v874, %v876
        %v880 = vsel %vm593, %v876, %v878
        %v884 = vadd.f32 %v861, %v879
        %v885 = vadd.f32 %v862, %v880
        %v886 = vadd.f32 %v863, %v878
        %v887 = vstv %s865
        %v888 = vmul.f32 %v887, %v365
        %v889 = vmul.f32 %v887, %v361
        %v890 = vmul.f32 %v887, %v366
        %894 = vrot.lane.b32.xlu0 %v888, 48
        %v895 = vpop.permute.xlu0 %894
        %896 = vrot.lane.b32.xlu0 %v889, 48
        %v897 = vpop.permute.xlu0 %896
        %898 = vrot.lane.b32.xlu0 %v890, 48
        %v899 = vpop.permute.xlu0 %898
        %v900 = vsel %vm593, %v895, %v897
        %v901 = vsel %vm593, %v897, %v899
        %v905 = vadd.f32 %v884, %v900
        %v906 = vadd.f32 %v885, %v901
        %v907 = vadd.f32 %v886, %v899
        %s908 = sld [smem:[#allocation8 + $0x2b]]
        %s909 = sld [smem:[#allocation8 + $0x5c]]
        %v910 = vstv %s908
        %v911 = vmul.f32 %v910, %v353
        %v912 = vmul.f32 %v910, %v349
        %v913 = vmul.f32 %v910, %v354
        %917 = vrot.lane.b32.xlu0 %v911, 32
        %v918 = vpop.permute.xlu0 %917
        %919 = vrot.lane.b32.xlu0 %v912, 32
        %v920 = vpop.permute.xlu0 %919
        %921 = vrot.lane.b32.xlu0 %v913, 32
        %v922 = vpop.permute.xlu0 %921
        %v923 = vsel %vm634, %v918, %v920
        %v924 = vsel %vm634, %v920, %v922
        %v928 = vadd.f32 %v905, %v923
        %v929 = vadd.f32 %v906, %v924
        %v930 = vadd.f32 %v907, %v922
        %v931 = vstv %s909
        %v932 = vmul.f32 %v931, %v365
        %v933 = vmul.f32 %v931, %v361
        %v934 = vmul.f32 %v931, %v366
        %938 = vrot.lane.b32.xlu0 %v932, 32
        %v939 = vpop.permute.xlu0 %938
        %940 = vrot.lane.b32.xlu0 %v933, 32
        %v941 = vpop.permute.xlu0 %940
        %942 = vrot.lane.b32.xlu0 %v934, 32
        %v943 = vpop.permute.xlu0 %942
        %v944 = vsel %vm634, %v939, %v941
        %v945 = vsel %vm634, %v941, %v943
        %v949 = vadd.f32 %v928, %v944
        %v950 = vadd.f32 %v929, %v945
        %v951 = vadd.f32 %v930, %v943
        %955 = vrot.lane.b32.xlu0 %v949, 127
        %v956 = vpop.permute.xlu0 %955
        %957 = vrot.lane.b32.xlu0 %v950, 127
        %v958 = vpop.permute.xlu0 %957
        %959 = vrot.lane.b32.xlu0 %v951, 127
        %v960 = vpop.permute.xlu0 %959
        %vm961 = vcmask 1039360
        %v962 = vsel %vm961, %v956, %v958
        %v963 = vsel %vm961, %v958, %v960
        %v966 = vsel %vm670, %v962, 0.0
        %v967 = vsel %vm671, %v963, 0.0
        %v968 = vadd.f32 %v662, %v966
        %v969 = vadd.f32 %v663, %v967
        %v970 = vadd.s32 %v392, 4294967295
        %v971 = vadd.s32 %v393, 4294967295
        %vm972 = vcmp.ge.s32.totalorder %v970, 0
        %vm973 = vcmp.ge.s32.totalorder %v971, 0
        %vm974 = vcmp.lt.s32.totalorder %v970, 16
        %vm975 = vcmp.lt.s32.totalorder %v971, 16
        %vm976 = vmand %vm972, %vm974
        %vm977 = vmand %vm973, %vm975
        %s978 = sld [smem:[#allocation8 + $0x2]]
        %s979 = sld [smem:[#allocation8 + $0x33]]
        %v980 = vstv %s978
        %v981 = vmul.f32 %v980, %v353
        %v982 = vmul.f32 %v980, %v349
        %v983 = vmul.f32 %v980, %v354
        %v984 = vadd.f32 %v981, 0.0
        %v985 = vadd.f32 %v982, 0.0
        %v986 = vadd.f32 %v983, 0.0
        %v987 = vstv %s979
        %v988 = vmul.f32 %v987, %v365
        %v989 = vmul.f32 %v987, %v361
        %v990 = vmul.f32 %v987, %v366
        %v991 = vadd.f32 %v984, %v988
        %v992 = vadd.f32 %v985, %v989
        %v993 = vadd.f32 %v986, %v990
        %s994 = sld [smem:[#allocation8 + $0x9]]
        %s995 = sld [smem:[#allocation8 + $0x3a]]
        %v996 = vstv %s994
        %v997 = vmul.f32 %v996, %v353
        %v998 = vmul.f32 %v996, %v349
        %v999 = vmul.f32 %v996, %v354
        %1003 = vrot.lane.b32.xlu0 %v997, 112
        %v1004 = vpop.permute.xlu0 %1003
        %1005 = vrot.lane.b32.xlu0 %v998, 112
        %v1006 = vpop.permute.xlu0 %1005
        %1007 = vrot.lane.b32.xlu0 %v999, 112
        %v1008 = vpop.permute.xlu0 %1007
        %v1009 = vsel %vm429, %v1004, %v1006
        %v1010 = vsel %vm429, %v1006, %v1008
        %v1014 = vadd.f32 %v991, %v1009
        %v1015 = vadd.f32 %v992, %v1010
        %v1016 = vadd.f32 %v993, %v1008
        %v1017 = vstv %s995
        %v1018 = vmul.f32 %v1017, %v365
        %v1019 = vmul.f32 %v1017, %v361
        %v1020 = vmul.f32 %v1017, %v366
        %1024 = vrot.lane.b32.xlu0 %v1018, 112
        %v1025 = vpop.permute.xlu0 %1024
        %1026 = vrot.lane.b32.xlu0 %v1019, 112
        %v1027 = vpop.permute.xlu0 %1026
        %1028 = vrot.lane.b32.xlu0 %v1020, 112
        %v1029 = vpop.permute.xlu0 %1028
        %v1030 = vsel %vm429, %v1025, %v1027
        %v1031 = vsel %vm429, %v1027, %v1029
        %v1035 = vadd.f32 %v1014, %v1030
        %v1036 = vadd.f32 %v1015, %v1031
        %v1037 = vadd.f32 %v1016, %v1029
        %s1038 = sld [smem:[#allocation8 + $0x10]]
        %s1039 = sld [smem:[#allocation8 + $0x41]]
        %v1040 = vstv %s1038
        %v1041 = vmul.f32 %v1040, %v353
        %v1042 = vmul.f32 %v1040, %v349
        %v1043 = vmul.f32 %v1040, %v354
        %1047 = vrot.lane.b32.xlu0 %v1041, 96
        %v1048 = vpop.permute.xlu0 %1047
        %1049 = vrot.lane.b32.xlu0 %v1042, 96
        %v1050 = vpop.permute.xlu0 %1049
        %1051 = vrot.lane.b32.xlu0 %v1043, 96
        %v1052 = vpop.permute.xlu0 %1051
        %v1053 = vsel %vm470, %v1048, %v1050
        %v1054 = vsel %vm470, %v1050, %v1052
        %v1058 = vadd.f32 %v1035, %v1053
        %v1059 = vadd.f32 %v1036, %v1054
        %v1060 = vadd.f32 %v1037, %v1052
        %v1061 = vstv %s1039
        %v1062 = vmul.f32 %v1061, %v365
        %v1063 = vmul.f32 %v1061, %v361
        %v1064 = vmul.f32 %v1061, %v366
        %1068 = vrot.lane.b32.xlu0 %v1062, 96
        %v1069 = vpop.permute.xlu0 %1068
        %1070 = vrot.lane.b32.xlu0 %v1063, 96
        %v1071 = vpop.permute.xlu0 %1070
        %1072 = vrot.lane.b32.xlu0 %v1064, 96
        %v1073 = vpop.permute.xlu0 %1072
        %v1074 = vsel %vm470, %v1069, %v1071
        %v1075 = vsel %vm470, %v1071, %v1073
        %v1079 = vadd.f32 %v1058, %v1074
        %v1080 = vadd.f32 %v1059, %v1075
        %v1081 = vadd.f32 %v1060, %v1073
        %s1082 = sld [smem:[#allocation8 + $0x17]]
        %s1083 = sld [smem:[#allocation8 + $0x48]]
        %v1084 = vstv %s1082
        %v1085 = vmul.f32 %v1084, %v353
        %v1086 = vmul.f32 %v1084, %v349
        %v1087 = vmul.f32 %v1084, %v354
        %1091 = vrot.lane.b32.xlu0 %v1085, 80
        %v1092 = vpop.permute.xlu0 %1091
        %1093 = vrot.lane.b32.xlu0 %v1086, 80
        %v1094 = vpop.permute.xlu0 %1093
        %1095 = vrot.lane.b32.xlu0 %v1087, 80
        %v1096 = vpop.permute.xlu0 %1095
        %v1097 = vsel %vm511, %v1092, %v1094
        %v1098 = vsel %vm511, %v1094, %v1096
        %v1102 = vadd.f32 %v1079, %v1097
        %v1103 = vadd.f32 %v1080, %v1098
        %v1104 = vadd.f32 %v1081, %v1096
        %v1105 = vstv %s1083
        %v1106 = vmul.f32 %v1105, %v365
        %v1107 = vmul.f32 %v1105, %v361
        %v1108 = vmul.f32 %v1105, %v366
        %1112 = vrot.lane.b32.xlu0 %v1106, 80
        %v1113 = vpop.permute.xlu0 %1112
        %1114 = vrot.lane.b32.xlu0 %v1107, 80
        %v1115 = vpop.permute.xlu0 %1114
        %1116 = vrot.lane.b32.xlu0 %v1108, 80
        %v1117 = vpop.permute.xlu0 %1116
        %v1118 = vsel %vm511, %v1113, %v1115
        %v1119 = vsel %vm511, %v1115, %v1117
        %v1123 = vadd.f32 %v1102, %v1118
        %v1124 = vadd.f32 %v1103, %v1119
        %v1125 = vadd.f32 %v1104, %v1117
        %s1126 = sld [smem:[#allocation8 + $0x1e]]
        %s1127 = sld [smem:[#allocation8 + $0x4f]]
        %v1128 = vstv %s1126
        %v1129 = vmul.f32 %v1128, %v353
        %v1130 = vmul.f32 %v1128, %v349
        %v1131 = vmul.f32 %v1128, %v354
        %1135 = vrot.lane.b32.xlu0 %v1129, 64
        %v1136 = vpop.permute.xlu0 %1135
        %1137 = vrot.lane.b32.xlu0 %v1130, 64
        %v1138 = vpop.permute.xlu0 %1137
        %1139 = vrot.lane.b32.xlu0 %v1131, 64
        %v1140 = vpop.permute.xlu0 %1139
        %v1141 = vsel %vm552, %v1136, %v1138
        %v1142 = vsel %vm552, %v1138, %v1140
        %v1146 = vadd.f32 %v1123, %v1141
        %v1147 = vadd.f32 %v1124, %v1142
        %v1148 = vadd.f32 %v1125, %v1140
        %v1149 = vstv %s1127
        %v1150 = vmul.f32 %v1149, %v365
        %v1151 = vmul.f32 %v1149, %v361
        %v1152 = vmul.f32 %v1149, %v366
        %1156 = vrot.lane.b32.xlu0 %v1150, 64
        %v1157 = vpop.permute.xlu0 %1156
        %1158 = vrot.lane.b32.xlu0 %v1151, 64
        %v1159 = vpop.permute.xlu0 %1158
        %1160 = vrot.lane.b32.xlu0 %v1152, 64
        %v1161 = vpop.permute.xlu0 %1160
        %v1162 = vsel %vm552, %v1157, %v1159
        %v1163 = vsel %vm552, %v1159, %v1161
        %v1167 = vadd.f32 %v1146, %v1162
        %v1168 = vadd.f32 %v1147, %v1163
        %v1169 = vadd.f32 %v1148, %v1161
        %s1170 = sld [smem:[#allocation8 + $0x25]]
        %s1171 = sld [smem:[#allocation8 + $0x56]]
        %v1172 = vstv %s1170
        %v1173 = vmul.f32 %v1172, %v353
        %v1174 = vmul.f32 %v1172, %v349
        %v1175 = vmul.f32 %v1172, %v354
        %1179 = vrot.lane.b32.xlu0 %v1173, 48
        %v1180 = vpop.permute.xlu0 %1179
        %1181 = vrot.lane.b32.xlu0 %v1174, 48
        %v1182 = vpop.permute.xlu0 %1181
        %1183 = vrot.lane.b32.xlu0 %v1175, 48
        %v1184 = vpop.permute.xlu0 %1183
        %v1185 = vsel %vm593, %v1180, %v1182
        %v1186 = vsel %vm593, %v1182, %v1184
        %v1190 = vadd.f32 %v1167, %v1185
        %v1191 = vadd.f32 %v1168, %v1186
        %v1192 = vadd.f32 %v1169, %v1184
        %v1193 = vstv %s1171
        %v1194 = vmul.f32 %v1193, %v365
        %v1195 = vmul.f32 %v1193, %v361
        %v1196 = vmul.f32 %v1193, %v366
        %1200 = vrot.lane.b32.xlu0 %v1194, 48
        %v1201 = vpop.permute.xlu0 %1200
        %1202 = vrot.lane.b32.xlu0 %v1195, 48
        %v1203 = vpop.permute.xlu0 %1202
        %1204 = vrot.lane.b32.xlu0 %v1196, 48
        %v1205 = vpop.permute.xlu0 %1204
        %v1206 = vsel %vm593, %v1201, %v1203
        %v1207 = vsel %vm593, %v1203, %v1205
        %v1211 = vadd.f32 %v1190, %v1206
        %v1212 = vadd.f32 %v1191, %v1207
        %v1213 = vadd.f32 %v1192, %v1205
        %s1214 = sld [smem:[#allocation8 + $0x2c]]
        %s1215 = sld [smem:[#allocation8 + $0x5d]]
        %v1216 = vstv %s1214
        %v1217 = vmul.f32 %v1216, %v353
        %v1218 = vmul.f32 %v1216, %v349
        %v1219 = vmul.f32 %v1216, %v354
        %1223 = vrot.lane.b32.xlu0 %v1217, 32
        %v1224 = vpop.permute.xlu0 %1223
        %1225 = vrot.lane.b32.xlu0 %v1218, 32
        %v1226 = vpop.permute.xlu0 %1225
        %1227 = vrot.lane.b32.xlu0 %v1219, 32
        %v1228 = vpop.permute.xlu0 %1227
        %v1229 = vsel %vm634, %v1224, %v1226
        %v1230 = vsel %vm634, %v1226, %v1228
        %v1234 = vadd.f32 %v1211, %v1229
        %v1235 = vadd.f32 %v1212, %v1230
        %v1236 = vadd.f32 %v1213, %v1228
        %v1237 = vstv %s1215
        %v1238 = vmul.f32 %v1237, %v365
        %v1239 = vmul.f32 %v1237, %v361
        %v1240 = vmul.f32 %v1237, %v366
        %1244 = vrot.lane.b32.xlu0 %v1238, 32
        %v1245 = vpop.permute.xlu0 %1244
        %1246 = vrot.lane.b32.xlu0 %v1239, 32
        %v1247 = vpop.permute.xlu0 %1246
        %1248 = vrot.lane.b32.xlu0 %v1240, 32
        %v1249 = vpop.permute.xlu0 %1248
        %v1250 = vsel %vm634, %v1245, %v1247
        %v1251 = vsel %vm634, %v1247, %v1249
        %v1255 = vadd.f32 %v1234, %v1250
        %v1256 = vadd.f32 %v1235, %v1251
        %v1257 = vadd.f32 %v1236, %v1249
        %1261 = vrot.lane.b32.xlu0 %v1255, 126
        %v1262 = vpop.permute.xlu0 %1261
        %1263 = vrot.lane.b32.xlu0 %v1256, 126
        %v1264 = vpop.permute.xlu0 %1263
        %1265 = vrot.lane.b32.xlu0 %v1257, 126
        %v1266 = vpop.permute.xlu0 %1265
        %vm1267 = vcmask 1031168
        %v1268 = vsel %vm1267, %v1262, %v1264
        %v1269 = vsel %vm1267, %v1264, %v1266
        %v1272 = vsel %vm976, %v1268, 0.0
        %v1273 = vsel %vm977, %v1269, 0.0
        %v1274 = vadd.f32 %v968, %v1272
        %v1275 = vadd.f32 %v969, %v1273
        %vm1276 = vcmp.ge.s32.totalorder %v392, 0
        %vm1277 = vcmp.ge.s32.totalorder %v393, 0
        %vm1278 = vcmp.lt.s32.totalorder %v392, 16
        %vm1279 = vcmp.lt.s32.totalorder %v393, 16
        %vm1280 = vmand %vm1276, %vm1278
        %vm1281 = vmand %vm1277, %vm1279
        %s1282 = sld [smem:[#allocation8 + $0x3]]
        %s1283 = sld [smem:[#allocation8 + $0x34]]
        %v1284 = vstv %s1282
        %v1285 = vmul.f32 %v1284, %v353
        %v1286 = vmul.f32 %v1284, %v349
        %v1287 = vmul.f32 %v1284, %v354
        %v1288 = vadd.f32 %v1285, 0.0
        %v1289 = vadd.f32 %v1286, 0.0
        %v1290 = vadd.f32 %v1287, 0.0
        %v1291 = vstv %s1283
        %v1292 = vmul.f32 %v1291, %v365
        %v1293 = vmul.f32 %v1291, %v361
        %v1294 = vmul.f32 %v1291, %v366
        %v1295 = vadd.f32 %v1288, %v1292
        %v1296 = vadd.f32 %v1289, %v1293
        %v1297 = vadd.f32 %v1290, %v1294
        %s1298 = sld [smem:[#allocation8 + $0xa]]
        %s1299 = sld [smem:[#allocation8 + $0x3b]]
        %v1300 = vstv %s1298
        %v1301 = vmul.f32 %v1300, %v353
        %v1302 = vmul.f32 %v1300, %v349
        %v1303 = vmul.f32 %v1300, %v354
        %1307 = vrot.lane.b32.xlu0 %v1301, 112
        %v1308 = vpop.permute.xlu0 %1307
        %1309 = vrot.lane.b32.xlu0 %v1302, 112
        %v1310 = vpop.permute.xlu0 %1309
        %1311 = vrot.lane.b32.xlu0 %v1303, 112
        %v1312 = vpop.permute.xlu0 %1311
        %v1313 = vsel %vm429, %v1308, %v1310
        %v1314 = vsel %vm429, %v1310, %v1312
        %v1318 = vadd.f32 %v1295, %v1313
        %v1319 = vadd.f32 %v1296, %v1314
        %v1320 = vadd.f32 %v1297, %v1312
        %v1321 = vstv %s1299
        %v1322 = vmul.f32 %v1321, %v365
        %v1323 = vmul.f32 %v1321, %v361
        %v1324 = vmul.f32 %v1321, %v366
        %1328 = vrot.lane.b32.xlu0 %v1322, 112
        %v1329 = vpop.permute.xlu0 %1328
        %1330 = vrot.lane.b32.xlu0 %v1323, 112
        %v1331 = vpop.permute.xlu0 %1330
        %1332 = vrot.lane.b32.xlu0 %v1324, 112
        %v1333 = vpop.permute.xlu0 %1332
        %v1334 = vsel %vm429, %v1329, %v1331
        %v1335 = vsel %vm429, %v1331, %v1333
        %v1339 = vadd.f32 %v1318, %v1334
        %v1340 = vadd.f32 %v1319, %v1335
        %v1341 = vadd.f32 %v1320, %v1333
        %s1342 = sld [smem:[#allocation8 + $0x11]]
        %s1343 = sld [smem:[#allocation8 + $0x42]]
        %v1344 = vstv %s1342
        %v1345 = vmul.f32 %v1344, %v353
        %v1346 = vmul.f32 %v1344, %v349
        %v1347 = vmul.f32 %v1344, %v354
        %1351 = vrot.lane.b32.xlu0 %v1345, 96
        %v1352 = vpop.permute.xlu0 %1351
        %1353 = vrot.lane.b32.xlu0 %v1346, 96
        %v1354 = vpop.permute.xlu0 %1353
        %1355 = vrot.lane.b32.xlu0 %v1347, 96
        %v1356 = vpop.permute.xlu0 %1355
        %v1357 = vsel %vm470, %v1352, %v1354
        %v1358 = vsel %vm470, %v1354, %v1356
        %v1362 = vadd.f32 %v1339, %v1357
        %v1363 = vadd.f32 %v1340, %v1358
        %v1364 = vadd.f32 %v1341, %v1356
        %v1365 = vstv %s1343
        %v1366 = vmul.f32 %v1365, %v365
        %v1367 = vmul.f32 %v1365, %v361
        %v1368 = vmul.f32 %v1365, %v366
        %1372 = vrot.lane.b32.xlu0 %v1366, 96
        %v1373 = vpop.permute.xlu0 %1372
        %1374 = vrot.lane.b32.xlu0 %v1367, 96
        %v1375 = vpop.permute.xlu0 %1374
        %1376 = vrot.lane.b32.xlu0 %v1368, 96
        %v1377 = vpop.permute.xlu0 %1376
        %v1378 = vsel %vm470, %v1373, %v1375
        %v1379 = vsel %vm470, %v1375, %v1377
        %v1383 = vadd.f32 %v1362, %v1378
        %v1384 = vadd.f32 %v1363, %v1379
        %v1385 = vadd.f32 %v1364, %v1377
        %s1386 = sld [smem:[#allocation8 + $0x18]]
        %s1387 = sld [smem:[#allocation8 + $0x49]]
        %v1388 = vstv %s1386
        %v1389 = vmul.f32 %v1388, %v353
        %v1390 = vmul.f32 %v1388, %v349
        %v1391 = vmul.f32 %v1388, %v354
        %1395 = vrot.lane.b32.xlu0 %v1389, 80
        %v1396 = vpop.permute.xlu0 %1395
        %1397 = vrot.lane.b32.xlu0 %v1390, 80
        %v1398 = vpop.permute.xlu0 %1397
        %1399 = vrot.lane.b32.xlu0 %v1391, 80
        %v1400 = vpop.permute.xlu0 %1399
        %v1401 = vsel %vm511, %v1396, %v1398
        %v1402 = vsel %vm511, %v1398, %v1400
        %v1406 = vadd.f32 %v1383, %v1401
        %v1407 = vadd.f32 %v1384, %v1402
        %v1408 = vadd.f32 %v1385, %v1400
        %v1409 = vstv %s1387
        %v1410 = vmul.f32 %v1409, %v365
        %v1411 = vmul.f32 %v1409, %v361
        %v1412 = vmul.f32 %v1409, %v366
        %1416 = vrot.lane.b32.xlu0 %v1410, 80
        %v1417 = vpop.permute.xlu0 %1416
        %1418 = vrot.lane.b32.xlu0 %v1411, 80
        %v1419 = vpop.permute.xlu0 %1418
        %1420 = vrot.lane.b32.xlu0 %v1412, 80
        %v1421 = vpop.permute.xlu0 %1420
        %v1422 = vsel %vm511, %v1417, %v1419
        %v1423 = vsel %vm511, %v1419, %v1421
        %v1427 = vadd.f32 %v1406, %v1422
        %v1428 = vadd.f32 %v1407, %v1423
        %v1429 = vadd.f32 %v1408, %v1421
        %s1430 = sld [smem:[#allocation8 + $0x1f]]
        %s1431 = sld [smem:[#allocation8 + $0x50]]
        %v1432 = vstv %s1430
        %v1433 = vmul.f32 %v1432, %v353
        %v1434 = vmul.f32 %v1432, %v349
        %v1435 = vmul.f32 %v1432, %v354
        %1439 = vrot.lane.b32.xlu0 %v1433, 64
        %v1440 = vpop.permute.xlu0 %1439
        %1441 = vrot.lane.b32.xlu0 %v1434, 64
        %v1442 = vpop.permute.xlu0 %1441
        %1443 = vrot.lane.b32.xlu0 %v1435, 64
        %v1444 = vpop.permute.xlu0 %1443
        %v1445 = vsel %vm552, %v1440, %v1442
        %v1446 = vsel %vm552, %v1442, %v1444
        %v1450 = vadd.f32 %v1427, %v1445
        %v1451 = vadd.f32 %v1428, %v1446
        %v1452 = vadd.f32 %v1429, %v1444
        %v1453 = vstv %s1431
        %v1454 = vmul.f32 %v1453, %v365
        %v1455 = vmul.f32 %v1453, %v361
        %v1456 = vmul.f32 %v1453, %v366
        %1460 = vrot.lane.b32.xlu0 %v1454, 64
        %v1461 = vpop.permute.xlu0 %1460
        %1462 = vrot.lane.b32.xlu0 %v1455, 64
        %v1463 = vpop.permute.xlu0 %1462
        %1464 = vrot.lane.b32.xlu0 %v1456, 64
        %v1465 = vpop.permute.xlu0 %1464
        %v1466 = vsel %vm552, %v1461, %v1463
        %v1467 = vsel %vm552, %v1463, %v1465
        %v1471 = vadd.f32 %v1450, %v1466
        %v1472 = vadd.f32 %v1451, %v1467
        %v1473 = vadd.f32 %v1452, %v1465
        %s1474 = sld [smem:[#allocation8 + $0x26]]
        %s1475 = sld [smem:[#allocation8 + $0x57]]
        %v1476 = vstv %s1474
        %v1477 = vmul.f32 %v1476, %v353
        %v1478 = vmul.f32 %v1476, %v349
        %v1479 = vmul.f32 %v1476, %v354
        %1483 = vrot.lane.b32.xlu0 %v1477, 48
        %v1484 = vpop.permute.xlu0 %1483
        %1485 = vrot.lane.b32.xlu0 %v1478, 48
        %v1486 = vpop.permute.xlu0 %1485
        %1487 = vrot.lane.b32.xlu0 %v1479, 48
        %v1488 = vpop.permute.xlu0 %1487
        %v1489 = vsel %vm593, %v1484, %v1486
        %v1490 = vsel %vm593, %v1486, %v1488
        %v1494 = vadd.f32 %v1471, %v1489
        %v1495 = vadd.f32 %v1472, %v1490
        %v1496 = vadd.f32 %v1473, %v1488
        %v1497 = vstv %s1475
        %v1498 = vmul.f32 %v1497, %v365
        %v1499 = vmul.f32 %v1497, %v361
        %v1500 = vmul.f32 %v1497, %v366
        %1504 = vrot.lane.b32.xlu0 %v1498, 48
        %v1505 = vpop.permute.xlu0 %1504
        %1506 = vrot.lane.b32.xlu0 %v1499, 48
        %v1507 = vpop.permute.xlu0 %1506
        %1508 = vrot.lane.b32.xlu0 %v1500, 48
        %v1509 = vpop.permute.xlu0 %1508
        %v1510 = vsel %vm593, %v1505, %v1507
        %v1511 = vsel %vm593, %v1507, %v1509
        %v1515 = vadd.f32 %v1494, %v1510
        %v1516 = vadd.f32 %v1495, %v1511
        %v1517 = vadd.f32 %v1496, %v1509
        %s1518 = sld [smem:[#allocation8 + $0x2d]]
        %s1519 = sld [smem:[#allocation8 + $0x5e]]
        %v1520 = vstv %s1518
        %v1521 = vmul.f32 %v1520, %v353
        %v1522 = vmul.f32 %v1520, %v349
        %v1523 = vmul.f32 %v1520, %v354
        %1527 = vrot.lane.b32.xlu0 %v1521, 32
        %v1528 = vpop.permute.xlu0 %1527
        %1529 = vrot.lane.b32.xlu0 %v1522, 32
        %v1530 = vpop.permute.xlu0 %1529
        %1531 = vrot.lane.b32.xlu0 %v1523, 32
        %v1532 = vpop.permute.xlu0 %1531
        %v1533 = vsel %vm634, %v1528, %v1530
        %v1534 = vsel %vm634, %v1530, %v1532
        %v1538 = vadd.f32 %v1515, %v1533
        %v1539 = vadd.f32 %v1516, %v1534
        %v1540 = vadd.f32 %v1517, %v1532
        %v1541 = vstv %s1519
        %v1542 = vmul.f32 %v1541, %v365
        %v1543 = vmul.f32 %v1541, %v361
        %v1544 = vmul.f32 %v1541, %v366
        %1548 = vrot.lane.b32.xlu0 %v1542, 32
        %v1549 = vpop.permute.xlu0 %1548
        %1550 = vrot.lane.b32.xlu0 %v1543, 32
        %v1551 = vpop.permute.xlu0 %1550
        %1552 = vrot.lane.b32.xlu0 %v1544, 32
        %v1553 = vpop.permute.xlu0 %1552
        %v1554 = vsel %vm634, %v1549, %v1551
        %v1555 = vsel %vm634, %v1551, %v1553
        %v1559 = vadd.f32 %v1538, %v1554
        %v1560 = vadd.f32 %v1539, %v1555
        %v1561 = vadd.f32 %v1540, %v1553
        %1565 = vrot.lane.b32.xlu0 %v1559, 125
        %v1566 = vpop.permute.xlu0 %1565
        %1567 = vrot.lane.b32.xlu0 %v1560, 125
        %v1568 = vpop.permute.xlu0 %1567
        %1569 = vrot.lane.b32.xlu0 %v1561, 125
        %v1570 = vpop.permute.xlu0 %1569
        %vm1571 = vcmask 1022976
        %v1572 = vsel %vm1571, %v1566, %v1568
        %v1573 = vsel %vm1571, %v1568, %v1570
        %v1576 = vsel %vm1280, %v1572, 0.0
        %v1577 = vsel %vm1281, %v1573, 0.0
        %v1578 = vadd.f32 %v1274, %v1576
        %v1579 = vadd.f32 %v1275, %v1577
        %v1580 = vadd.s32 %v392, 1
        %v1581 = vadd.s32 %v393, 1
        %vm1582 = vcmp.ge.s32.totalorder %v1580, 0
        %vm1583 = vcmp.ge.s32.totalorder %v1581, 0
        %vm1584 = vcmp.lt.s32.totalorder %v1580, 16
        %vm1585 = vcmp.lt.s32.totalorder %v1581, 16
        %vm1586 = vmand %vm1582, %vm1584
        %vm1587 = vmand %vm1583, %vm1585
        %s1588 = sld [smem:[#allocation8 + $0x4]]
        %s1589 = sld [smem:[#allocation8 + $0x35]]
        %v1590 = vstv %s1588
        %v1591 = vmul.f32 %v1590, %v353
        %v1592 = vmul.f32 %v1590, %v349
        %v1593 = vmul.f32 %v1590, %v354
        %v1594 = vadd.f32 %v1591, 0.0
        %v1595 = vadd.f32 %v1592, 0.0
        %v1596 = vadd.f32 %v1593, 0.0
        %v1597 = vstv %s1589
        %v1598 = vmul.f32 %v1597, %v365
        %v1599 = vmul.f32 %v1597, %v361
        %v1600 = vmul.f32 %v1597, %v366
        %v1601 = vadd.f32 %v1594, %v1598
        %v1602 = vadd.f32 %v1595, %v1599
        %v1603 = vadd.f32 %v1596, %v1600
        %s1604 = sld [smem:[#allocation8 + $0xb]]
        %s1605 = sld [smem:[#allocation8 + $0x3c]]
        %v1606 = vstv %s1604
        %v1607 = vmul.f32 %v1606, %v353
        %v1608 = vmul.f32 %v1606, %v349
        %v1609 = vmul.f32 %v1606, %v354
        %1613 = vrot.lane.b32.xlu0 %v1607, 112
        %v1614 = vpop.permute.xlu0 %1613
        %1615 = vrot.lane.b32.xlu0 %v1608, 112
        %v1616 = vpop.permute.xlu0 %1615
        %1617 = vrot.lane.b32.xlu0 %v1609, 112
        %v1618 = vpop.permute.xlu0 %1617
        %v1619 = vsel %vm429, %v1614, %v1616
        %v1620 = vsel %vm429, %v1616, %v1618
        %v1624 = vadd.f32 %v1601, %v1619
        %v1625 = vadd.f32 %v1602, %v1620
        %v1626 = vadd.f32 %v1603, %v1618
        %v1627 = vstv %s1605
        %v1628 = vmul.f32 %v1627, %v365
        %v1629 = vmul.f32 %v1627, %v361
        %v1630 = vmul.f32 %v1627, %v366
        %1634 = vrot.lane.b32.xlu0 %v1628, 112
        %v1635 = vpop.permute.xlu0 %1634
        %1636 = vrot.lane.b32.xlu0 %v1629, 112
        %v1637 = vpop.permute.xlu0 %1636
        %1638 = vrot.lane.b32.xlu0 %v1630, 112
        %v1639 = vpop.permute.xlu0 %1638
        %v1640 = vsel %vm429, %v1635, %v1637
        %v1641 = vsel %vm429, %v1637, %v1639
        %v1645 = vadd.f32 %v1624, %v1640
        %v1646 = vadd.f32 %v1625, %v1641
        %v1647 = vadd.f32 %v1626, %v1639
        %s1648 = sld [smem:[#allocation8 + $0x12]]
        %s1649 = sld [smem:[#allocation8 + $0x43]]
        %v1650 = vstv %s1648
        %v1651 = vmul.f32 %v1650, %v353
        %v1652 = vmul.f32 %v1650, %v349
        %v1653 = vmul.f32 %v1650, %v354
        %1657 = vrot.lane.b32.xlu0 %v1651, 96
        %v1658 = vpop.permute.xlu0 %1657
        %1659 = vrot.lane.b32.xlu0 %v1652, 96
        %v1660 = vpop.permute.xlu0 %1659
        %1661 = vrot.lane.b32.xlu0 %v1653, 96
        %v1662 = vpop.permute.xlu0 %1661
        %v1663 = vsel %vm470, %v1658, %v1660
        %v1664 = vsel %vm470, %v1660, %v1662
        %v1668 = vadd.f32 %v1645, %v1663
        %v1669 = vadd.f32 %v1646, %v1664
        %v1670 = vadd.f32 %v1647, %v1662
        %v1671 = vstv %s1649
        %v1672 = vmul.f32 %v1671, %v365
        %v1673 = vmul.f32 %v1671, %v361
        %v1674 = vmul.f32 %v1671, %v366
        %1678 = vrot.lane.b32.xlu0 %v1672, 96
        %v1679 = vpop.permute.xlu0 %1678
        %1680 = vrot.lane.b32.xlu0 %v1673, 96
        %v1681 = vpop.permute.xlu0 %1680
        %1682 = vrot.lane.b32.xlu0 %v1674, 96
        %v1683 = vpop.permute.xlu0 %1682
        %v1684 = vsel %vm470, %v1679, %v1681
        %v1685 = vsel %vm470, %v1681, %v1683
        %v1689 = vadd.f32 %v1668, %v1684
        %v1690 = vadd.f32 %v1669, %v1685
        %v1691 = vadd.f32 %v1670, %v1683
        %s1692 = sld [smem:[#allocation8 + $0x19]]
        %s1693 = sld [smem:[#allocation8 + $0x4a]]
        %v1694 = vstv %s1692
        %v1695 = vmul.f32 %v1694, %v353
        %v1696 = vmul.f32 %v1694, %v349
        %v1697 = vmul.f32 %v1694, %v354
        %1701 = vrot.lane.b32.xlu0 %v1695, 80
        %v1702 = vpop.permute.xlu0 %1701
        %1703 = vrot.lane.b32.xlu0 %v1696, 80
        %v1704 = vpop.permute.xlu0 %1703
        %1705 = vrot.lane.b32.xlu0 %v1697, 80
        %v1706 = vpop.permute.xlu0 %1705
        %v1707 = vsel %vm511, %v1702, %v1704
        %v1708 = vsel %vm511, %v1704, %v1706
        %v1712 = vadd.f32 %v1689, %v1707
        %v1713 = vadd.f32 %v1690, %v1708
        %v1714 = vadd.f32 %v1691, %v1706
        %v1715 = vstv %s1693
        %v1716 = vmul.f32 %v1715, %v365
        %v1717 = vmul.f32 %v1715, %v361
        %v1718 = vmul.f32 %v1715, %v366
        %1722 = vrot.lane.b32.xlu0 %v1716, 80
        %v1723 = vpop.permute.xlu0 %1722
        %1724 = vrot.lane.b32.xlu0 %v1717, 80
        %v1725 = vpop.permute.xlu0 %1724
        %1726 = vrot.lane.b32.xlu0 %v1718, 80
        %v1727 = vpop.permute.xlu0 %1726
        %v1728 = vsel %vm511, %v1723, %v1725
        %v1729 = vsel %vm511, %v1725, %v1727
        %v1733 = vadd.f32 %v1712, %v1728
        %v1734 = vadd.f32 %v1713, %v1729
        %v1735 = vadd.f32 %v1714, %v1727
        %s1736 = sld [smem:[#allocation8 + $0x20]]
        %s1737 = sld [smem:[#allocation8 + $0x51]]
        %v1738 = vstv %s1736
        %v1739 = vmul.f32 %v1738, %v353
        %v1740 = vmul.f32 %v1738, %v349
        %v1741 = vmul.f32 %v1738, %v354
        %1745 = vrot.lane.b32.xlu0 %v1739, 64
        %v1746 = vpop.permute.xlu0 %1745
        %1747 = vrot.lane.b32.xlu0 %v1740, 64
        %v1748 = vpop.permute.xlu0 %1747
        %1749 = vrot.lane.b32.xlu0 %v1741, 64
        %v1750 = vpop.permute.xlu0 %1749
        %v1751 = vsel %vm552, %v1746, %v1748
        %v1752 = vsel %vm552, %v1748, %v1750
        %v1756 = vadd.f32 %v1733, %v1751
        %v1757 = vadd.f32 %v1734, %v1752
        %v1758 = vadd.f32 %v1735, %v1750
        %v1759 = vstv %s1737
        %v1760 = vmul.f32 %v1759, %v365
        %v1761 = vmul.f32 %v1759, %v361
        %v1762 = vmul.f32 %v1759, %v366
        %1766 = vrot.lane.b32.xlu0 %v1760, 64
        %v1767 = vpop.permute.xlu0 %1766
        %1768 = vrot.lane.b32.xlu0 %v1761, 64
        %v1769 = vpop.permute.xlu0 %1768
        %1770 = vrot.lane.b32.xlu0 %v1762, 64
        %v1771 = vpop.permute.xlu0 %1770
        %v1772 = vsel %vm552, %v1767, %v1769
        %v1773 = vsel %vm552, %v1769, %v1771
        %v1777 = vadd.f32 %v1756, %v1772
        %v1778 = vadd.f32 %v1757, %v1773
        %v1779 = vadd.f32 %v1758, %v1771
        %s1780 = sld [smem:[#allocation8 + $0x27]]
        %s1781 = sld [smem:[#allocation8 + $0x58]]
        %v1782 = vstv %s1780
        %v1783 = vmul.f32 %v1782, %v353
        %v1784 = vmul.f32 %v1782, %v349
        %v1785 = vmul.f32 %v1782, %v354
        %1789 = vrot.lane.b32.xlu0 %v1783, 48
        %v1790 = vpop.permute.xlu0 %1789
        %1791 = vrot.lane.b32.xlu0 %v1784, 48
        %v1792 = vpop.permute.xlu0 %1791
        %1793 = vrot.lane.b32.xlu0 %v1785, 48
        %v1794 = vpop.permute.xlu0 %1793
        %v1795 = vsel %vm593, %v1790, %v1792
        %v1796 = vsel %vm593, %v1792, %v1794
        %v1800 = vadd.f32 %v1777, %v1795
        %v1801 = vadd.f32 %v1778, %v1796
        %v1802 = vadd.f32 %v1779, %v1794
        %v1803 = vstv %s1781
        %v1804 = vmul.f32 %v1803, %v365
        %v1805 = vmul.f32 %v1803, %v361
        %v1806 = vmul.f32 %v1803, %v366
        %1810 = vrot.lane.b32.xlu0 %v1804, 48
        %v1811 = vpop.permute.xlu0 %1810
        %1812 = vrot.lane.b32.xlu0 %v1805, 48
        %v1813 = vpop.permute.xlu0 %1812
        %1814 = vrot.lane.b32.xlu0 %v1806, 48
        %v1815 = vpop.permute.xlu0 %1814
        %v1816 = vsel %vm593, %v1811, %v1813
        %v1817 = vsel %vm593, %v1813, %v1815
        %v1821 = vadd.f32 %v1800, %v1816
        %v1822 = vadd.f32 %v1801, %v1817
        %v1823 = vadd.f32 %v1802, %v1815
        %s1824 = sld [smem:[#allocation8 + $0x2e]]
        %s1825 = sld [smem:[#allocation8 + $0x5f]]
        %v1826 = vstv %s1824
        %v1827 = vmul.f32 %v1826, %v353
        %v1828 = vmul.f32 %v1826, %v349
        %v1829 = vmul.f32 %v1826, %v354
        %1833 = vrot.lane.b32.xlu0 %v1827, 32
        %v1834 = vpop.permute.xlu0 %1833
        %1835 = vrot.lane.b32.xlu0 %v1828, 32
        %v1836 = vpop.permute.xlu0 %1835
        %1837 = vrot.lane.b32.xlu0 %v1829, 32
        %v1838 = vpop.permute.xlu0 %1837
        %v1839 = vsel %vm634, %v1834, %v1836
        %v1840 = vsel %vm634, %v1836, %v1838
        %v1844 = vadd.f32 %v1821, %v1839
        %v1845 = vadd.f32 %v1822, %v1840
        %v1846 = vadd.f32 %v1823, %v1838
        %v1847 = vstv %s1825
        %v1848 = vmul.f32 %v1847, %v365
        %v1849 = vmul.f32 %v1847, %v361
        %v1850 = vmul.f32 %v1847, %v366
        %1854 = vrot.lane.b32.xlu0 %v1848, 32
        %v1855 = vpop.permute.xlu0 %1854
        %1856 = vrot.lane.b32.xlu0 %v1849, 32
        %v1857 = vpop.permute.xlu0 %1856
        %1858 = vrot.lane.b32.xlu0 %v1850, 32
        %v1859 = vpop.permute.xlu0 %1858
        %v1860 = vsel %vm634, %v1855, %v1857
        %v1861 = vsel %vm634, %v1857, %v1859
        %v1865 = vadd.f32 %v1844, %v1860
        %v1866 = vadd.f32 %v1845, %v1861
        %v1867 = vadd.f32 %v1846, %v1859
        %1871 = vrot.lane.b32.xlu0 %v1865, 124
        %v1872 = vpop.permute.xlu0 %1871
        %1873 = vrot.lane.b32.xlu0 %v1866, 124
        %v1874 = vpop.permute.xlu0 %1873
        %1875 = vrot.lane.b32.xlu0 %v1867, 124
        %v1876 = vpop.permute.xlu0 %1875
        %vm1877 = vcmask 1014784
        %v1878 = vsel %vm1877, %v1872, %v1874
        %v1879 = vsel %vm1877, %v1874, %v1876
        %v1882 = vsel %vm1586, %v1878, 0.0
        %v1883 = vsel %vm1587, %v1879, 0.0
        %v1884 = vadd.f32 %v1578, %v1882
        %v1885 = vadd.f32 %v1579, %v1883
        %v1886 = vadd.s32 %v392, 2
        %v1887 = vadd.s32 %v393, 2
        %vm1888 = vcmp.ge.s32.totalorder %v1886, 0
        %vm1889 = vcmp.ge.s32.totalorder %v1887, 0
        %vm1890 = vcmp.lt.s32.totalorder %v1886, 16
        %vm1891 = vcmp.lt.s32.totalorder %v1887, 16
        %vm1892 = vmand %vm1888, %vm1890
        %vm1893 = vmand %vm1889, %vm1891
        %s1894 = sld [smem:[#allocation8 + $0x5]]
        %s1895 = sld [smem:[#allocation8 + $0x36]]
        %v1896 = vstv %s1894
        %v1897 = vmul.f32 %v1896, %v353
        %v1898 = vmul.f32 %v1896, %v349
        %v1899 = vmul.f32 %v1896, %v354
        %v1900 = vadd.f32 %v1897, 0.0
        %v1901 = vadd.f32 %v1898, 0.0
        %v1902 = vadd.f32 %v1899, 0.0
        %v1903 = vstv %s1895
        %v1904 = vmul.f32 %v1903, %v365
        %v1905 = vmul.f32 %v1903, %v361
        %v1906 = vmul.f32 %v1903, %v366
        %v1907 = vadd.f32 %v1900, %v1904
        %v1908 = vadd.f32 %v1901, %v1905
        %v1909 = vadd.f32 %v1902, %v1906
        %s1910 = sld [smem:[#allocation8 + $0xc]]
        %s1911 = sld [smem:[#allocation8 + $0x3d]]
        %v1912 = vstv %s1910
        %v1913 = vmul.f32 %v1912, %v353
        %v1914 = vmul.f32 %v1912, %v349
        %v1915 = vmul.f32 %v1912, %v354
        %1919 = vrot.lane.b32.xlu0 %v1913, 112
        %v1920 = vpop.permute.xlu0 %1919
        %1921 = vrot.lane.b32.xlu0 %v1914, 112
        %v1922 = vpop.permute.xlu0 %1921
        %1923 = vrot.lane.b32.xlu0 %v1915, 112
        %v1924 = vpop.permute.xlu0 %1923
        %v1925 = vsel %vm429, %v1920, %v1922
        %v1926 = vsel %vm429, %v1922, %v1924
        %v1930 = vadd.f32 %v1907, %v1925
        %v1931 = vadd.f32 %v1908, %v1926
        %v1932 = vadd.f32 %v1909, %v1924
        %v1933 = vstv %s1911
        %v1934 = vmul.f32 %v1933, %v365
        %v1935 = vmul.f32 %v1933, %v361
        %v1936 = vmul.f32 %v1933, %v366
        %1940 = vrot.lane.b32.xlu0 %v1934, 112
        %v1941 = vpop.permute.xlu0 %1940
        %1942 = vrot.lane.b32.xlu0 %v1935, 112
        %v1943 = vpop.permute.xlu0 %1942
        %1944 = vrot.lane.b32.xlu0 %v1936, 112
        %v1945 = vpop.permute.xlu0 %1944
        %v1946 = vsel %vm429, %v1941, %v1943
        %v1947 = vsel %vm429, %v1943, %v1945
        %v1951 = vadd.f32 %v1930, %v1946
        %v1952 = vadd.f32 %v1931, %v1947
        %v1953 = vadd.f32 %v1932, %v1945
        %s1954 = sld [smem:[#allocation8 + $0x13]]
        %s1955 = sld [smem:[#allocation8 + $0x44]]
        %v1956 = vstv %s1954
        %v1957 = vmul.f32 %v1956, %v353
        %v1958 = vmul.f32 %v1956, %v349
        %v1959 = vmul.f32 %v1956, %v354
        %1963 = vrot.lane.b32.xlu0 %v1957, 96
        %v1964 = vpop.permute.xlu0 %1963
        %1965 = vrot.lane.b32.xlu0 %v1958, 96
        %v1966 = vpop.permute.xlu0 %1965
        %1967 = vrot.lane.b32.xlu0 %v1959, 96
        %v1968 = vpop.permute.xlu0 %1967
        %v1969 = vsel %vm470, %v1964, %v1966
        %v1970 = vsel %vm470, %v1966, %v1968
        %v1974 = vadd.f32 %v1951, %v1969
        %v1975 = vadd.f32 %v1952, %v1970
        %v1976 = vadd.f32 %v1953, %v1968
        %v1977 = vstv %s1955
        %v1978 = vmul.f32 %v1977, %v365
        %v1979 = vmul.f32 %v1977, %v361
        %v1980 = vmul.f32 %v1977, %v366
        %1984 = vrot.lane.b32.xlu0 %v1978, 96
        %v1985 = vpop.permute.xlu0 %1984
        %1986 = vrot.lane.b32.xlu0 %v1979, 96
        %v1987 = vpop.permute.xlu0 %1986
        %1988 = vrot.lane.b32.xlu0 %v1980, 96
        %v1989 = vpop.permute.xlu0 %1988
        %v1990 = vsel %vm470, %v1985, %v1987
        %v1991 = vsel %vm470, %v1987, %v1989
        %v1995 = vadd.f32 %v1974, %v1990
        %v1996 = vadd.f32 %v1975, %v1991
        %v1997 = vadd.f32 %v1976, %v1989
        %s1998 = sld [smem:[#allocation8 + $0x1a]]
        %s1999 = sld [smem:[#allocation8 + $0x4b]]
        %v2000 = vstv %s1998
        %v2001 = vmul.f32 %v2000, %v353
        %v2002 = vmul.f32 %v2000, %v349
        %v2003 = vmul.f32 %v2000, %v354
        %2007 = vrot.lane.b32.xlu0 %v2001, 80
        %v2008 = vpop.permute.xlu0 %2007
        %2009 = vrot.lane.b32.xlu0 %v2002, 80
        %v2010 = vpop.permute.xlu0 %2009
        %2011 = vrot.lane.b32.xlu0 %v2003, 80
        %v2012 = vpop.permute.xlu0 %2011
        %v2013 = vsel %vm511, %v2008, %v2010
        %v2014 = vsel %vm511, %v2010, %v2012
        %v2018 = vadd.f32 %v1995, %v2013
        %v2019 = vadd.f32 %v1996, %v2014
        %v2020 = vadd.f32 %v1997, %v2012
        %v2021 = vstv %s1999
        %v2022 = vmul.f32 %v2021, %v365
        %v2023 = vmul.f32 %v2021, %v361
        %v2024 = vmul.f32 %v2021, %v366
        %2028 = vrot.lane.b32.xlu0 %v2022, 80
        %v2029 = vpop.permute.xlu0 %2028
        %2030 = vrot.lane.b32.xlu0 %v2023, 80
        %v2031 = vpop.permute.xlu0 %2030
        %2032 = vrot.lane.b32.xlu0 %v2024, 80
        %v2033 = vpop.permute.xlu0 %2032
        %v2034 = vsel %vm511, %v2029, %v2031
        %v2035 = vsel %vm511, %v2031, %v2033
        %v2039 = vadd.f32 %v2018, %v2034
        %v2040 = vadd.f32 %v2019, %v2035
        %v2041 = vadd.f32 %v2020, %v2033
        %s2042 = sld [smem:[#allocation8 + $0x21]]
        %s2043 = sld [smem:[#allocation8 + $0x52]]
        %v2044 = vstv %s2042
        %v2045 = vmul.f32 %v2044, %v353
        %v2046 = vmul.f32 %v2044, %v349
        %v2047 = vmul.f32 %v2044, %v354
        %2051 = vrot.lane.b32.xlu0 %v2045, 64
        %v2052 = vpop.permute.xlu0 %2051
        %2053 = vrot.lane.b32.xlu0 %v2046, 64
        %v2054 = vpop.permute.xlu0 %2053
        %2055 = vrot.lane.b32.xlu0 %v2047, 64
        %v2056 = vpop.permute.xlu0 %2055
        %v2057 = vsel %vm552, %v2052, %v2054
        %v2058 = vsel %vm552, %v2054, %v2056
        %v2062 = vadd.f32 %v2039, %v2057
        %v2063 = vadd.f32 %v2040, %v2058
        %v2064 = vadd.f32 %v2041, %v2056
        %v2065 = vstv %s2043
        %v2066 = vmul.f32 %v2065, %v365
        %v2067 = vmul.f32 %v2065, %v361
        %v2068 = vmul.f32 %v2065, %v366
        %2072 = vrot.lane.b32.xlu0 %v2066, 64
        %v2073 = vpop.permute.xlu0 %2072
        %2074 = vrot.lane.b32.xlu0 %v2067, 64
        %v2075 = vpop.permute.xlu0 %2074
        %2076 = vrot.lane.b32.xlu0 %v2068, 64
        %v2077 = vpop.permute.xlu0 %2076
        %v2078 = vsel %vm552, %v2073, %v2075
        %v2079 = vsel %vm552, %v2075, %v2077
        %v2083 = vadd.f32 %v2062, %v2078
        %v2084 = vadd.f32 %v2063, %v2079
        %v2085 = vadd.f32 %v2064, %v2077
        %s2086 = sld [smem:[#allocation8 + $0x28]]
        %s2087 = sld [smem:[#allocation8 + $0x59]]
        %v2088 = vstv %s2086
        %v2089 = vmul.f32 %v2088, %v353
        %v2090 = vmul.f32 %v2088, %v349
        %v2091 = vmul.f32 %v2088, %v354
        %2095 = vrot.lane.b32.xlu0 %v2089, 48
        %v2096 = vpop.permute.xlu0 %2095
        %2097 = vrot.lane.b32.xlu0 %v2090, 48
        %v2098 = vpop.permute.xlu0 %2097
        %2099 = vrot.lane.b32.xlu0 %v2091, 48
        %v2100 = vpop.permute.xlu0 %2099
        %v2101 = vsel %vm593, %v2096, %v2098
        %v2102 = vsel %vm593, %v2098, %v2100
        %v2106 = vadd.f32 %v2083, %v2101
        %v2107 = vadd.f32 %v2084, %v2102
        %v2108 = vadd.f32 %v2085, %v2100
        %v2109 = vstv %s2087
        %v2110 = vmul.f32 %v2109, %v365
        %v2111 = vmul.f32 %v2109, %v361
        %v2112 = vmul.f32 %v2109, %v366
        %2116 = vrot.lane.b32.xlu0 %v2110, 48
        %v2117 = vpop.permute.xlu0 %2116
        %2118 = vrot.lane.b32.xlu0 %v2111, 48
        %v2119 = vpop.permute.xlu0 %2118
        %2120 = vrot.lane.b32.xlu0 %v2112, 48
        %v2121 = vpop.permute.xlu0 %2120
        %v2122 = vsel %vm593, %v2117, %v2119
        %v2123 = vsel %vm593, %v2119, %v2121
        %v2127 = vadd.f32 %v2106, %v2122
        %v2128 = vadd.f32 %v2107, %v2123
        %v2129 = vadd.f32 %v2108, %v2121
        %s2130 = sld [smem:[#allocation8 + $0x2f]]
        %s2131 = sld [smem:[#allocation8 + $0x60]]
        %v2132 = vstv %s2130
        %v2133 = vmul.f32 %v2132, %v353
        %v2134 = vmul.f32 %v2132, %v349
        %v2135 = vmul.f32 %v2132, %v354
        %2139 = vrot.lane.b32.xlu0 %v2133, 32
        %v2140 = vpop.permute.xlu0 %2139
        %2141 = vrot.lane.b32.xlu0 %v2134, 32
        %v2142 = vpop.permute.xlu0 %2141
        %2143 = vrot.lane.b32.xlu0 %v2135, 32
        %v2144 = vpop.permute.xlu0 %2143
        %v2145 = vsel %vm634, %v2140, %v2142
        %v2146 = vsel %vm634, %v2142, %v2144
        %v2150 = vadd.f32 %v2127, %v2145
        %v2151 = vadd.f32 %v2128, %v2146
        %v2152 = vadd.f32 %v2129, %v2144
        %v2153 = vstv %s2131
        %v2154 = vmul.f32 %v2153, %v365
        %v2155 = vmul.f32 %v2153, %v361
        %v2156 = vmul.f32 %v2153, %v366
        %2160 = vrot.lane.b32.xlu0 %v2154, 32
        %v2161 = vpop.permute.xlu0 %2160
        %2162 = vrot.lane.b32.xlu0 %v2155, 32
        %v2163 = vpop.permute.xlu0 %2162
        %2164 = vrot.lane.b32.xlu0 %v2156, 32
        %v2165 = vpop.permute.xlu0 %2164
        %v2166 = vsel %vm634, %v2161, %v2163
        %v2167 = vsel %vm634, %v2163, %v2165
        %v2171 = vadd.f32 %v2150, %v2166
        %v2172 = vadd.f32 %v2151, %v2167
        %v2173 = vadd.f32 %v2152, %v2165
        %2177 = vrot.lane.b32.xlu0 %v2171, 123
        %v2178 = vpop.permute.xlu0 %2177
        %2179 = vrot.lane.b32.xlu0 %v2172, 123
        %v2180 = vpop.permute.xlu0 %2179
        %2181 = vrot.lane.b32.xlu0 %v2173, 123
        %v2182 = vpop.permute.xlu0 %2181
        %vm2183 = vcmask 1006592
        %v2184 = vsel %vm2183, %v2178, %v2180
        %v2185 = vsel %vm2183, %v2180, %v2182
        %v2188 = vsel %vm1892, %v2184, 0.0
        %v2189 = vsel %vm1893, %v2185, 0.0
        %v2190 = vadd.f32 %v1884, %v2188
        %v2191 = vadd.f32 %v1885, %v2189
        %v2192 = vadd.s32 %v392, 3
        %v2193 = vadd.s32 %v393, 3
        %vm2194 = vcmp.ge.s32.totalorder %v2192, 0
        %vm2195 = vcmp.ge.s32.totalorder %v2193, 0
        %vm2196 = vcmp.lt.s32.totalorder %v2192, 16
        %vm2197 = vcmp.lt.s32.totalorder %v2193, 16
        %vm2198 = vmand %vm2194, %vm2196
        %vm2199 = vmand %vm2195, %vm2197
        %s2200 = sld [smem:[#allocation8 + $0x6]]
        %s2201 = sld [smem:[#allocation8 + $0x37]]
        %v2202 = vstv %s2200
        %v2203 = vmul.f32 %v2202, %v353
        %v2204 = vmul.f32 %v2202, %v349
        %v2205 = vmul.f32 %v2202, %v354
        %v2206 = vadd.f32 %v2203, 0.0
        %v2207 = vadd.f32 %v2204, 0.0
        %v2208 = vadd.f32 %v2205, 0.0
        %v2209 = vstv %s2201
        %v2210 = vmul.f32 %v2209, %v365
        %v2211 = vmul.f32 %v2209, %v361
        %v2212 = vmul.f32 %v2209, %v366
        %v2213 = vadd.f32 %v2206, %v2210
        %v2214 = vadd.f32 %v2207, %v2211
        %v2215 = vadd.f32 %v2208, %v2212
        %s2216 = sld [smem:[#allocation8 + $0xd]]
        %s2217 = sld [smem:[#allocation8 + $0x3e]]
        %v2218 = vstv %s2216
        %v2219 = vmul.f32 %v2218, %v353
        %v2220 = vmul.f32 %v2218, %v349
        %v2221 = vmul.f32 %v2218, %v354
        %2225 = vrot.lane.b32.xlu0 %v2219, 112
        %v2226 = vpop.permute.xlu0 %2225
        %2227 = vrot.lane.b32.xlu0 %v2220, 112
        %v2228 = vpop.permute.xlu0 %2227
        %2229 = vrot.lane.b32.xlu0 %v2221, 112
        %v2230 = vpop.permute.xlu0 %2229
        %v2231 = vsel %vm429, %v2226, %v2228
        %v2232 = vsel %vm429, %v2228, %v2230
        %v2236 = vadd.f32 %v2213, %v2231
        %v2237 = vadd.f32 %v2214, %v2232
        %v2238 = vadd.f32 %v2215, %v2230
        %v2239 = vstv %s2217
        %v2240 = vmul.f32 %v2239, %v365
        %v2241 = vmul.f32 %v2239, %v361
        %v2242 = vmul.f32 %v2239, %v366
        %2246 = vrot.lane.b32.xlu0 %v2240, 112
        %v2247 = vpop.permute.xlu0 %2246
        %2248 = vrot.lane.b32.xlu0 %v2241, 112
        %v2249 = vpop.permute.xlu0 %2248
        %2250 = vrot.lane.b32.xlu0 %v2242, 112
        %v2251 = vpop.permute.xlu0 %2250
        %v2252 = vsel %vm429, %v2247, %v2249
        %v2253 = vsel %vm429, %v2249, %v2251
        %v2257 = vadd.f32 %v2236, %v2252
        %v2258 = vadd.f32 %v2237, %v2253
        %v2259 = vadd.f32 %v2238, %v2251
        %s2260 = sld [smem:[#allocation8 + $0x14]]
        %s2261 = sld [smem:[#allocation8 + $0x45]]
        %v2262 = vstv %s2260
        %v2263 = vmul.f32 %v2262, %v353
        %v2264 = vmul.f32 %v2262, %v349
        %v2265 = vmul.f32 %v2262, %v354
        %2269 = vrot.lane.b32.xlu0 %v2263, 96
        %v2270 = vpop.permute.xlu0 %2269
        %2271 = vrot.lane.b32.xlu0 %v2264, 96
        %v2272 = vpop.permute.xlu0 %2271
        %2273 = vrot.lane.b32.xlu0 %v2265, 96
        %v2274 = vpop.permute.xlu0 %2273
        %v2275 = vsel %vm470, %v2270, %v2272
        %v2276 = vsel %vm470, %v2272, %v2274
        %v2280 = vadd.f32 %v2257, %v2275
        %v2281 = vadd.f32 %v2258, %v2276
        %v2282 = vadd.f32 %v2259, %v2274
        %v2283 = vstv %s2261
        %v2284 = vmul.f32 %v2283, %v365
        %v2285 = vmul.f32 %v2283, %v361
        %v2286 = vmul.f32 %v2283, %v366
        %2290 = vrot.lane.b32.xlu0 %v2284, 96
        %v2291 = vpop.permute.xlu0 %2290
        %2292 = vrot.lane.b32.xlu0 %v2285, 96
        %v2293 = vpop.permute.xlu0 %2292
        %2294 = vrot.lane.b32.xlu0 %v2286, 96
        %v2295 = vpop.permute.xlu0 %2294
        %v2296 = vsel %vm470, %v2291, %v2293
        %v2297 = vsel %vm470, %v2293, %v2295
        %v2301 = vadd.f32 %v2280, %v2296
        %v2302 = vadd.f32 %v2281, %v2297
        %v2303 = vadd.f32 %v2282, %v2295
        %s2304 = sld [smem:[#allocation8 + $0x1b]]
        %s2305 = sld [smem:[#allocation8 + $0x4c]]
        %v2306 = vstv %s2304
        %v2307 = vmul.f32 %v2306, %v353
        %v2308 = vmul.f32 %v2306, %v349
        %v2309 = vmul.f32 %v2306, %v354
        %2313 = vrot.lane.b32.xlu0 %v2307, 80
        %v2314 = vpop.permute.xlu0 %2313
        %2315 = vrot.lane.b32.xlu0 %v2308, 80
        %v2316 = vpop.permute.xlu0 %2315
        %2317 = vrot.lane.b32.xlu0 %v2309, 80
        %v2318 = vpop.permute.xlu0 %2317
        %v2319 = vsel %vm511, %v2314, %v2316
        %v2320 = vsel %vm511, %v2316, %v2318
        %v2324 = vadd.f32 %v2301, %v2319
        %v2325 = vadd.f32 %v2302, %v2320
        %v2326 = vadd.f32 %v2303, %v2318
        %v2327 = vstv %s2305
        %v2328 = vmul.f32 %v2327, %v365
        %v2329 = vmul.f32 %v2327, %v361
        %v2330 = vmul.f32 %v2327, %v366
        %2334 = vrot.lane.b32.xlu0 %v2328, 80
        %v2335 = vpop.permute.xlu0 %2334
        %2336 = vrot.lane.b32.xlu0 %v2329, 80
        %v2337 = vpop.permute.xlu0 %2336
        %2338 = vrot.lane.b32.xlu0 %v2330, 80
        %v2339 = vpop.permute.xlu0 %2338
        %v2340 = vsel %vm511, %v2335, %v2337
        %v2341 = vsel %vm511, %v2337, %v2339
        %v2345 = vadd.f32 %v2324, %v2340
        %v2346 = vadd.f32 %v2325, %v2341
        %v2347 = vadd.f32 %v2326, %v2339
        %s2348 = sld [smem:[#allocation8 + $0x22]]
        %s2349 = sld [smem:[#allocation8 + $0x53]]
        %v2350 = vstv %s2348
        %v2351 = vmul.f32 %v2350, %v353
        %v2352 = vmul.f32 %v2350, %v349
        %v2353 = vmul.f32 %v2350, %v354
        %2357 = vrot.lane.b32.xlu0 %v2351, 64
        %v2358 = vpop.permute.xlu0 %2357
        %2359 = vrot.lane.b32.xlu0 %v2352, 64
        %v2360 = vpop.permute.xlu0 %2359
        %2361 = vrot.lane.b32.xlu0 %v2353, 64
        %v2362 = vpop.permute.xlu0 %2361
        %v2363 = vsel %vm552, %v2358, %v2360
        %v2364 = vsel %vm552, %v2360, %v2362
        %v2368 = vadd.f32 %v2345, %v2363
        %v2369 = vadd.f32 %v2346, %v2364
        %v2370 = vadd.f32 %v2347, %v2362
        %v2371 = vstv %s2349
        %v2372 = vmul.f32 %v2371, %v365
        %v2373 = vmul.f32 %v2371, %v361
        %v2374 = vmul.f32 %v2371, %v366
        %2378 = vrot.lane.b32.xlu0 %v2372, 64
        %v2379 = vpop.permute.xlu0 %2378
        %2380 = vrot.lane.b32.xlu0 %v2373, 64
        %v2381 = vpop.permute.xlu0 %2380
        %2382 = vrot.lane.b32.xlu0 %v2374, 64
        %v2383 = vpop.permute.xlu0 %2382
        %v2384 = vsel %vm552, %v2379, %v2381
        %v2385 = vsel %vm552, %v2381, %v2383
        %v2389 = vadd.f32 %v2368, %v2384
        %v2390 = vadd.f32 %v2369, %v2385
        %v2391 = vadd.f32 %v2370, %v2383
        %s2392 = sld [smem:[#allocation8 + $0x29]]
        %s2393 = sld [smem:[#allocation8 + $0x5a]]
        %v2394 = vstv %s2392
        %v2395 = vmul.f32 %v2394, %v353
        %v2396 = vmul.f32 %v2394, %v349
        %v2397 = vmul.f32 %v2394, %v354
        %2401 = vrot.lane.b32.xlu0 %v2395, 48
        %v2402 = vpop.permute.xlu0 %2401
        %2403 = vrot.lane.b32.xlu0 %v2396, 48
        %v2404 = vpop.permute.xlu0 %2403
        %2405 = vrot.lane.b32.xlu0 %v2397, 48
        %v2406 = vpop.permute.xlu0 %2405
        %v2407 = vsel %vm593, %v2402, %v2404
        %v2408 = vsel %vm593, %v2404, %v2406
        %v2412 = vadd.f32 %v2389, %v2407
        %v2413 = vadd.f32 %v2390, %v2408
        %v2414 = vadd.f32 %v2391, %v2406
        %v2415 = vstv %s2393
        %v2416 = vmul.f32 %v2415, %v365
        %v2417 = vmul.f32 %v2415, %v361
        %v2418 = vmul.f32 %v2415, %v366
        %2422 = vrot.lane.b32.xlu0 %v2416, 48
        %v2423 = vpop.permute.xlu0 %2422
        %2424 = vrot.lane.b32.xlu0 %v2417, 48
        %v2425 = vpop.permute.xlu0 %2424
        %2426 = vrot.lane.b32.xlu0 %v2418, 48
        %v2427 = vpop.permute.xlu0 %2426
        %v2428 = vsel %vm593, %v2423, %v2425
        %v2429 = vsel %vm593, %v2425, %v2427
        %v2433 = vadd.f32 %v2412, %v2428
        %v2434 = vadd.f32 %v2413, %v2429
        %v2435 = vadd.f32 %v2414, %v2427
        %s2436 = sld [smem:[#allocation8 + $0x30]]
        %s2437 = sld [smem:[#allocation8 + $0x61]]
        %v2438 = vstv %s2436
        %v2439 = vmul.f32 %v2438, %v353
        %v2440 = vmul.f32 %v2438, %v349
        %v2441 = vmul.f32 %v2438, %v354
        %2445 = vrot.lane.b32.xlu0 %v2439, 32
        %v2446 = vpop.permute.xlu0 %2445
        %2447 = vrot.lane.b32.xlu0 %v2440, 32
        %v2448 = vpop.permute.xlu0 %2447
        %2449 = vrot.lane.b32.xlu0 %v2441, 32
        %v2450 = vpop.permute.xlu0 %2449
        %v2451 = vsel %vm634, %v2446, %v2448
        %v2452 = vsel %vm634, %v2448, %v2450
        %v2456 = vadd.f32 %v2433, %v2451
        %v2457 = vadd.f32 %v2434, %v2452
        %v2458 = vadd.f32 %v2435, %v2450
        %v2459 = vstv %s2437
        %v2460 = vmul.f32 %v2459, %v365
        %v2461 = vmul.f32 %v2459, %v361
        %v2462 = vmul.f32 %v2459, %v366
        %2466 = vrot.lane.b32.xlu0 %v2460, 32
        %v2467 = vpop.permute.xlu0 %2466
        %2468 = vrot.lane.b32.xlu0 %v2461, 32
        %v2469 = vpop.permute.xlu0 %2468
        %2470 = vrot.lane.b32.xlu0 %v2462, 32
        %v2471 = vpop.permute.xlu0 %2470
        %v2472 = vsel %vm634, %v2467, %v2469
        %v2473 = vsel %vm634, %v2469, %v2471
        %v2477 = vadd.f32 %v2456, %v2472
        %v2478 = vadd.f32 %v2457, %v2473
        %v2479 = vadd.f32 %v2458, %v2471
        %2483 = vrot.lane.b32.xlu0 %v2477, 122
        %v2484 = vpop.permute.xlu0 %2483
        %2485 = vrot.lane.b32.xlu0 %v2478, 122
        %v2486 = vpop.permute.xlu0 %2485
        %2487 = vrot.lane.b32.xlu0 %v2479, 122
        %v2488 = vpop.permute.xlu0 %2487
        %vm2489 = vcmask 998400
        %v2490 = vsel %vm2489, %v2484, %v2486
        %v2491 = vsel %vm2489, %v2486, %v2488
        %v2494 = vsel %vm2198, %v2490, 0.0
        %v2495 = vsel %vm2199, %v2491, 0.0
        %v2496 = vadd.f32 %v2190, %v2494
        %v2497 = vadd.f32 %v2191, %v2495
        %v2498 = vxor.u32 %v2496, 2147483648
        %v2499 = vxor.u32 %v2497, 2147483648
        %v2500 = vmul.f32 %v2498, 1.442695
        %v2501 = vpow.pop %v2500
        %v2502 = vmul.f32 %v2499, 1.442695
        %v2503 = vpow.pop %v2502
        %v2504 = vadd.f32 %v2501, 1.0
        %v2505 = vadd.f32 %v2503, 1.0
        %v2506 = vrcp.pop %v2504
        %v2507 = vmul.f32 1.0, %v2506
        %v2508 = vrcp.pop %v2505
        %v2509 = vmul.f32 1.0, %v2508
        %v2510 = vlaneseq
        %v2511 = vshrl.u32 %v2510, 7
        %v2512 = vsub.s32 0, %v2511
        %v2513 = vrot.slane %v2507, %v2512
        %v2514 = vlaneseq
        %v2515 = vshrl.u32 %v2514, 7
        %v2516 = vsub.s32 0, %v2515
        %v2517 = vrot.slane %v2509, %v2516
        %v2520 = vcombine.low %v2513, %v2517
        %v2522 = vmul.f32 %v306, %v2520
        %2523 = vst [vmem:[%s240] sm:$0xff] %v2522
        %s2524 = sand.u32 %s120, 1
        %s2525 = scalar_lea.sflag [#allocation4], %s2524
        %s2526 = sand.u32 %s120, 1
        %s2527 = smul.addr %s2526, 8
        %s2528 = scalar_lea.vmem [#allocation9], %s2527
        // Predicated region
        $region49: #{tpu_custom_call.1} parent=35 // pred_check
          %p2529 = pneg %p130
        $region50: #{tpu_custom_call.1} parent=35 // pred_check_branch
          %2531 = sbr.rel (%p2529) target = $region52
        $region51: #{tpu_custom_call.1} parent=35 // pred_region
          %s2533 = ssub.s32 128, 128
          %2534 = vsyncadd %s2525, %s2533
          %s2535 = smul.addr %s23, 2
          %s2536 = smul.addr %s2535, 64
          %s2537 = scalar_lea.hbm %s4, %s2536
          %s2539 = sshll.u32 %s2528, 4
          %s2540 = int_to_ptr.vmem [resolvable:$true] %s2539
          %2542 = dma.vmem_to_hbm [thread:$0]  %s2540, 128, %s2537, %s2525
        $region52: #{tpu_custom_call.1} parent=35 // pred_fallthru
          _
      $region36: #{tpu_custom_call.1} parent=5 // pred_fallthru
        _
      %p2543 = scmp.le.s32.totalorder 2, %s18
      // Predicated region
      $region53: #{tpu_custom_call.1} parent=5 // pred_check
        %p2544 = pneg %p2543
      $region54: #{tpu_custom_call.1} parent=5 // pred_check_branch
        %2546 = sbr.rel (%p2544) target = $region56
      $region55: #{tpu_custom_call.1} parent=5 // pred_region
        %s2547 = ssub.s32 %s18, 2
        // Predicated region
        $region57: #{tpu_custom_call.1} parent=55 // pred_check
          %p2548 = pneg %p136
        $region58: #{tpu_custom_call.1} parent=55 // pred_check_branch
          %2550 = sbr.rel (%p2548) target = $region60
        $region59: #{tpu_custom_call.1} parent=55 // pred_region
          %s2551 = sand.u32 %s121, 1
          %s2552 = scalar_lea.sflag [#allocation4], %s2551
          %s2553 = sand.u32 %s121, 1
          %s2554 = smul.addr %s2553, 8
          %s2555 = scalar_lea.vmem [#allocation9], %s2554
          %2556 = dma.done %s2552, 128
        $region60: #{tpu_custom_call.1} parent=55 // pred_fallthru
          _
      $region56: #{tpu_custom_call.1} parent=5 // pred_fallthru
        _
    $region6: #{tpu_custom_call.1} parent=1 // loop_footer
      %s22 = sadd.s32 1, %s18
    $region7: #{tpu_custom_call.1} parent=1 // loop_footer_branch
      %17 = sbr.rel target = $region3
    $region8: #{tpu_custom_call.1} parent=1 // loop_exit
      _
    %2557 = vsyncpa [#allocation3], 1
    %s2558 = scalar_lea.sflag [#allocation3], 1
    %2559 = vsyncpa %s2558, 1
    %2560 = vsyncpa [#allocation7], 1
    %2561 = vsyncpa [#allocation4], 1
    %s2562 = scalar_lea.sflag [#allocation4], 1
    %2563 = vsyncpa %s2562, 1
    %2564 = vsyncpa [#allocation5], 1
    %s2565 = scalar_lea.sflag [#allocation5], 1
    %2566 = vsyncpa %s2565, 1

</llo_original>
